<compile_context>
chip_gen: v7x
topology: tpu7x:2x2x1
jax: 0.10.0
libtpu: 0.0.40
codegen_flags: <defaults>
</compile_context>

<pallas_src>
import jax
import jax.numpy as jnp
from jax.experimental import pallas as pl
from jax.experimental.pallas import tpu as pltpu

K = 7                  # conv kernel size (nn.Conv2d(2, 1, 7, padding=3, bias=False))
PAD = K // 2           # "same" padding
LANE = 128             # TPU vreg lane width


def _round_up(x, m):
    return ((x + m - 1) // m) * m


def _pick_channel_tile(C, band_len, budget_bytes):
    """Largest channel tile that divides C, is full-C or a multiple of 8 (block
    second-minor-dim constraint), and keeps the double-buffered x block inside
    the VMEM budget (matters on v7x's 64 MiB VMEM)."""
    def fits(t):
        return 2 * t * band_len * 4 <= budget_bytes
    if fits(C):
        return C
    best = None
    for t in range(8, C, 8):
        if C % t == 0 and fits(t):
            best = t
    if best is not None:
        return best
    return 8 if C % 8 == 0 else C


def _make_kernel(C_total, ct, Wp, band_start, band_len):
    """band_start: 128-aligned lane offset of the pooled band inside the scratch
    row.  band_len = H * Wp = flattened output-slab length."""
    base = band_start - PAD * Wp          # >= 0; scratch offset of tap (0,0), pixel (0,0)

    def kernel(w_ref, x_ref, o_ref, pp_ref):
        # w_ref : (2*K*K,) f32 SMEM   — conv1 weight flattened [in_ch, kh, kw]
        # x_ref : (ct, band_len) VMEM — channel tile of x, W-padded & flattened
        # o_ref : (1, band_len)       — flattened output slab (row stride Wp)
        # pp_ref: (2, LS) f32 scratch — row 0: running sum, row 1: running max
        c_step = pl.program_id(1)
        n_csteps = pl.num_programs(1)

        # ---- one fused pass over this channel tile: running sum and max ----
        x0 = x_ref[pl.ds(0, 1), :].astype(jnp.float32)
        s = x0
        m = x0
        for c in range(1, ct):                         # static unroll, ct small
            xc = x_ref[pl.ds(c, 1), :].astype(jnp.float32)
            s = s + xc
            m = jnp.maximum(m, xc)

        band = pl.ds(band_start, band_len)

        @pl.when(c_step == 0)
        def _init():
            # Zero scratch once per image: the zero region around the band is
            # exactly the conv's zero padding (no concatenates, no relayouts).
            pp_ref[...] = jnp.zeros_like(pp_ref)
            pp_ref[pl.ds(0, 1), band] = s
            pp_ref[pl.ds(1, 1), band] = m

        @pl.when(c_step > 0)
        def _accumulate():
            pp_ref[pl.ds(0, 1), band] += s
            pp_ref[pl.ds(1, 1), band] = jnp.maximum(pp_ref[pl.ds(1, 1), band], m)

        @pl.when(c_step == n_csteps - 1)
        def _finalize():
            avg_row = pp_ref[pl.ds(0, 1), :] * (1.0 / C_total)   # (1, LS)
            max_row = pp_ref[pl.ds(1, 1), :]                     # (1, LS)

            # Hoist all 98 SMEM scalar weight reads out of the tap loop.
            wa = [w_ref[t] for t in range(K * K)]            # avg-channel taps
            wm = [w_ref[K * K + t] for t in range(K * K)]    # max-channel taps

            # 7x7 conv over the two pooled planes (49 static taps each).
            # Each tap is a static lane-slice of a row already held in vregs;
            # 4 independent accumulator chains keep the VALU slots busy.
            J = band_len
            accs = [jnp.zeros((1, J), jnp.float32) for _ in range(4)]
            t = 0
            for kh in range(K):
                row_off = base + kh * Wp
                for kw in range(K):
                    q = row_off + kw
                    accs[t % 4] = (accs[t % 4]
                                   + wa[t] * avg_row[:, q:q + J]
                                   + wm[t] * max_row[:, q:q + J])
                    t += 1
            acc = (accs[0] + accs[1]) + (accs[2] + accs[3])
            o_ref[...] = jax.nn.sigmoid(acc).astype(o_ref.dtype)

    return kernel


def spatial_attention(x, weight, *, channel_tile=None,
                      vmem_budget_bytes=16 * 1024 * 1024):
    """x: (N, C, H, W); weight: (1, 2, K, K) OIHW (no bias). Returns (N, 1, H, W)."""
    N, C, H, W = x.shape
    assert weight.shape == (1, 2, K, K)

    Wp = W + 2 * PAD                              # W-padded row length
    band_len = H * Wp                             # pooled band / output slab length
    band_start = _round_up(PAD * Wp, LANE)        # lane-aligned band offset in scratch
    base = band_start - PAD * Wp
    # Scratch row must cover the furthest tap read (garbage lanes read zeros).
    scratch_len = _round_up(base + (K - 1) * (Wp + 1) + band_len, LANE)

    # Zero-pad along W only and flatten (H, Wp) onto the lane axis (XLA fuses this).
    xw = jnp.pad(x, ((0, 0), (0, 0), (0, 0), (PAD, PAD)))
    xf = xw.reshape(N, C, band_len)

    w_flat = weight.reshape(-1).astype(jnp.float32)          # (2*K*K,)

    ct = channel_tile if channel_tile is not None else _pick_channel_tile(
        C, band_len, vmem_budget_bytes)
    assert C % ct == 0 and (ct == C or ct % 8 == 0), (C, ct)

    grid = (N, C // ct)   # batch: parallel (megacore / v7x 2 TCs); channels: reduction

    kernel = _make_kernel(C_total=C, ct=ct, Wp=Wp,
                          band_start=band_start, band_len=band_len)

    out_flat = pl.pallas_call(
        kernel,
        out_shape=jax.ShapeDtypeStruct((N, 1, band_len), x.dtype),
        grid=grid,
        in_specs=[
            pl.BlockSpec(memory_space=pltpu.MemorySpace.SMEM),           # weights
            pl.BlockSpec((pl.Squeezed(), ct, band_len),
                         lambda n, c: (n, c, 0)),                        # x tile
        ],
        out_specs=pl.BlockSpec((pl.Squeezed(), 1, band_len),
                               lambda n, c: (n, 0, 0)),
        scratch_shapes=[pltpu.VMEM((2, scratch_len), jnp.float32)],
        compiler_params=pltpu.CompilerParams(
            dimension_semantics=("parallel", "arbitrary"),
            vmem_limit_bytes=32 * 1024 * 1024),
    )(w_flat, xf)

    # Un-flatten (row stride is Wp) and drop the Wp - W garbage columns.
    return out_flat.reshape(N, 1, H, Wp)[:, :, :, :W]


def reference(x, weight):
    """Pure-JAX reference matching the PyTorch forward."""
    avg = jnp.mean(x, axis=1, keepdims=True)
    mx = jnp.max(x, axis=1, keepdims=True)
    cat = jnp.concatenate([avg, mx], axis=1)
    conv = jax.lax.conv_general_dilated(
        cat, weight, window_strides=(1, 1),
        padding=((PAD, PAD), (PAD, PAD)),
        dimension_numbers=("NCHW", "OIHW", "NCHW"))
    return jax.nn.sigmoid(conv)


if __name__ == "__main__":
    key = jax.random.PRNGKey(0)
    kx, kw = jax.random.split(key)

    N, C, H, W = 2, 4, 16, 16
    x = jax.random.normal(kx, (N, C, H, W), dtype=jnp.float32)

    # Deterministic Conv2d(2, 1, 7, bias=False) init (kaiming-uniform-like).
    fan_in = 2 * K * K
    bound = 1.0 / jnp.sqrt(jnp.float32(fan_in))
    weight = jax.random.uniform(kw, (1, 2, K, K), dtype=jnp.float32,
                                minval=-bound, maxval=bound)

    fn = jax.jit(spatial_attention)
    out = fn(x, weight)
    out = jax.block_until_ready(out)

    ref = reference(x, weight)
    assert out.shape == (N, 1, H, W)
    assert jnp.allclose(out, ref, atol=1e-5, rtol=1e-5)

    print("KERNEL_OK")
</pallas_src>

<mosaic_0001>
module attributes {stable_mosaic.version = 11 : i64} {
  func.func @kernel(%arg0: i32, %arg1: i32, %arg2: memref<98xf32, #tpu.memory_space<smem>>, %arg3: memref<1x4x352xf32, #tpu.memory_space<vmem>>, %arg4: memref<1x1x352xf32, #tpu.memory_space<vmem>>, %arg5: memref<2x640xf32, #tpu.memory_space<vmem>>) attributes {dimension_semantics = [#tpu.dimension_semantics<parallel>, #tpu.dimension_semantics<arbitrary>], iteration_bounds = array<i64: 2, 1>, scalar_prefetch = 0 : i64, scratch_operands = 1 : i64, tpu.core_type = #tpu.core_type<tc>, window_params = [{transform_indices = @transform_0, window_bounds = array<i64: 98>}, {transform_indices = @transform_1, window_bounds = array<i64: 1, 4, 352>}, {transform_indices = @transform_2, window_bounds = array<i64: 1, 1, 352>}]} {
    %c0 = arith.constant 0 : index
    %c0_0 = arith.constant 0 : index
    %c0_1 = arith.constant 0 : index
    %0 = vector.load %arg3[%c0, %c0_0, %c0_1] : memref<1x4x352xf32, #tpu.memory_space<vmem>>, vector<1x1x352xf32>
    %1 = vector.shape_cast %0 : vector<1x1x352xf32> to vector<1x352xf32>
    %c0_2 = arith.constant 0 : index
    %c1 = arith.constant 1 : index
    %c0_3 = arith.constant 0 : index
    %2 = vector.load %arg3[%c0_2, %c1, %c0_3] : memref<1x4x352xf32, #tpu.memory_space<vmem>>, vector<1x1x352xf32>
    %3 = vector.shape_cast %2 : vector<1x1x352xf32> to vector<1x352xf32>
    %4 = arith.addf %1, %3 : vector<1x352xf32>
    %5 = arith.maximumf %1, %3 : vector<1x352xf32>
    %c0_4 = arith.constant 0 : index
    %c2 = arith.constant 2 : index
    %c0_5 = arith.constant 0 : index
    %6 = vector.load %arg3[%c0_4, %c2, %c0_5] : memref<1x4x352xf32, #tpu.memory_space<vmem>>, vector<1x1x352xf32>
    %7 = vector.shape_cast %6 : vector<1x1x352xf32> to vector<1x352xf32>
    %8 = arith.addf %4, %7 : vector<1x352xf32>
    %9 = arith.maximumf %5, %7 : vector<1x352xf32>
    %c0_6 = arith.constant 0 : index
    %c3 = arith.constant 3 : index
    %c0_7 = arith.constant 0 : index
    %10 = vector.load %arg3[%c0_6, %c3, %c0_7] : memref<1x4x352xf32, #tpu.memory_space<vmem>>, vector<1x1x352xf32>
    %11 = vector.shape_cast %10 : vector<1x1x352xf32> to vector<1x352xf32>
    %12 = arith.addf %8, %11 : vector<1x352xf32>
    %13 = arith.maximumf %9, %11 : vector<1x352xf32>
    %c0_i32 = arith.constant 0 : i32
    %14 = arith.cmpi eq, %arg1, %c0_i32 : i32
    %15 = arith.extui %14 : i1 to i32
    %c0_i32_8 = arith.constant 0 : i32
    %16 = arith.cmpi ne, %15, %c0_i32_8 : i32
    scf.if %16 {
      %cst = arith.constant 0.000000e+00 : f32
      %23 = vector.broadcast %cst : f32 to vector<2x640xf32>
      %c0_13 = arith.constant 0 : index
      %c0_14 = arith.constant 0 : index
      %24 = vector.load %arg5[%c0_13, %c0_14] : memref<2x640xf32, #tpu.memory_space<vmem>>, vector<2x640xf32>
      tpu.vector_store %arg5[%c0_13, %c0_14], %23 {strides = array<i32>} : memref<2x640xf32, #tpu.memory_space<vmem>>, vector<2x640xf32>,
      %c0_15 = arith.constant 0 : index
      %c128 = arith.constant 128 : index
      %25 = vector.load %arg5[%c0_15, %c128] : memref<2x640xf32, #tpu.memory_space<vmem>>, vector<1x352xf32>
      tpu.vector_store %arg5[%c0_15, %c128], %12 {strides = array<i32>} : memref<2x640xf32, #tpu.memory_space<vmem>>, vector<1x352xf32>,
      %c1_16 = arith.constant 1 : index
      %c128_17 = arith.constant 128 : index
      %26 = vector.load %arg5[%c1_16, %c128_17] : memref<2x640xf32, #tpu.memory_space<vmem>>, vector<1x352xf32>
      tpu.vector_store %arg5[%c1_16, %c128_17], %13 {strides = array<i32>} : memref<2x640xf32, #tpu.memory_space<vmem>>, vector<1x352xf32>,
    } else {
    }
    %c0_i32_9 = arith.constant 0 : i32
    %17 = arith.cmpi sgt, %arg1, %c0_i32_9 : i32
    %18 = arith.extui %17 : i1 to i32
    %c0_i32_10 = arith.constant 0 : i32
    %19 = arith.cmpi ne, %18, %c0_i32_10 : i32
    scf.if %19 {
      %c0_13 = arith.constant 0 : index
      %c128 = arith.constant 128 : index
      %23 = vector.load %arg5[%c0_13, %c128] : memref<2x640xf32, #tpu.memory_space<vmem>>, vector<1x352xf32>
      %24 = arith.addf %23, %12 : vector<1x352xf32>
      %c0_14 = arith.constant 0 : index
      %c128_15 = arith.constant 128 : index
      %25 = vector.load %arg5[%c0_14, %c128_15] : memref<2x640xf32, #tpu.memory_space<vmem>>, vector<1x352xf32>
      tpu.vector_store %arg5[%c0_14, %c128_15], %24 {strides = array<i32>} : memref<2x640xf32, #tpu.memory_space<vmem>>, vector<1x352xf32>,
      %c1_16 = arith.constant 1 : index
      %c128_17 = arith.constant 128 : index
      %26 = vector.load %arg5[%c1_16, %c128_17] : memref<2x640xf32, #tpu.memory_space<vmem>>, vector<1x352xf32>
      %27 = arith.maximumf %26, %13 : vector<1x352xf32>
      %c1_18 = arith.constant 1 : index
      %c128_19 = arith.constant 128 : index
      %28 = vector.load %arg5[%c1_18, %c128_19] : memref<2x640xf32, #tpu.memory_space<vmem>>, vector<1x352xf32>
      tpu.vector_store %arg5[%c1_18, %c128_19], %27 {strides = array<i32>} : memref<2x640xf32, #tpu.memory_space<vmem>>, vector<1x352xf32>,
    } else {
    }
    %c0_i32_11 = arith.constant 0 : i32
    %20 = arith.cmpi eq, %arg1, %c0_i32_11 : i32
    %21 = arith.extui %20 : i1 to i32
    %c0_i32_12 = arith.constant 0 : i32
    %22 = arith.cmpi ne, %21, %c0_i32_12 : i32
    scf.if %22 {
      %c0_13 = arith.constant 0 : index
      %c0_14 = arith.constant 0 : index
      %23 = vector.load %arg5[%c0_13, %c0_14] : memref<2x640xf32, #tpu.memory_space<vmem>>, vector<1x640xf32>
      %cst = arith.constant 2.500000e-01 : f32
      %24 = vector.broadcast %cst : f32 to vector<1x640xf32>
      %25 = arith.mulf %23, %24 : vector<1x640xf32>
      %c1_15 = arith.constant 1 : index
      %c0_16 = arith.constant 0 : index
      %26 = vector.load %arg5[%c1_15, %c0_16] : memref<2x640xf32, #tpu.memory_space<vmem>>, vector<1x640xf32>
      %c0_17 = arith.constant 0 : index
      %27 = memref.load %arg2[%c0_17] : memref<98xf32, #tpu.memory_space<smem>>
      %c1_18 = arith.constant 1 : index
      %28 = memref.load %arg2[%c1_18] : memref<98xf32, #tpu.memory_space<smem>>
      %c2_19 = arith.constant 2 : index
      %29 = memref.load %arg2[%c2_19] : memref<98xf32, #tpu.memory_space<smem>>
      %c3_20 = arith.constant 3 : index
      %30 = memref.load %arg2[%c3_20] : memref<98xf32, #tpu.memory_space<smem>>
      %c4 = arith.constant 4 : index
      %31 = memref.load %arg2[%c4] : memref<98xf32, #tpu.memory_space<smem>>
      %c5 = arith.constant 5 : index
      %32 = memref.load %arg2[%c5] : memref<98xf32, #tpu.memory_space<smem>>
      %c6 = arith.constant 6 : index
      %33 = memref.load %arg2[%c6] : memref<98xf32, #tpu.memory_space<smem>>
      %c7 = arith.constant 7 : index
      %34 = memref.load %arg2[%c7] : memref<98xf32, #tpu.memory_space<smem>>
      %c8 = arith.constant 8 : index
      %35 = memref.load %arg2[%c8] : memref<98xf32, #tpu.memory_space<smem>>
      %c9 = arith.constant 9 : index
      %36 = memref.load %arg2[%c9] : memref<98xf32, #tpu.memory_space<smem>>
      %c10 = arith.constant 10 : index
      %37 = memref.load %arg2[%c10] : memref<98xf32, #tpu.memory_space<smem>>
      %c11 = arith.constant 11 : index
      %38 = memref.load %arg2[%c11] : memref<98xf32, #tpu.memory_space<smem>>
      %c12 = arith.constant 12 : index
      %39 = memref.load %arg2[%c12] : memref<98xf32, #tpu.memory_space<smem>>
      %c13 = arith.constant 13 : index
      %40 = memref.load %arg2[%c13] : memref<98xf32, #tpu.memory_space<smem>>
      %c14 = arith.constant 14 : index
      %41 = memref.load %arg2[%c14] : memref<98xf32, #tpu.memory_space<smem>>
      %c15 = arith.constant 15 : index
      %42 = memref.load %arg2[%c15] : memref<98xf32, #tpu.memory_space<smem>>
      %c16 = arith.constant 16 : index
      %43 = memref.load %arg2[%c16] : memref<98xf32, #tpu.memory_space<smem>>
      %c17 = arith.constant 17 : index
      %44 = memref.load %arg2[%c17] : memref<98xf32, #tpu.memory_space<smem>>
      %c18 = arith.constant 18 : index
      %45 = memref.load %arg2[%c18] : memref<98xf32, #tpu.memory_space<smem>>
      %c19 = arith.constant 19 : index
      %46 = memref.load %arg2[%c19] : memref<98xf32, #tpu.memory_space<smem>>
      %c20 = arith.constant 20 : index
      %47 = memref.load %arg2[%c20] : memref<98xf32, #tpu.memory_space<smem>>
      %c21 = arith.constant 21 : index
      %48 = memref.load %arg2[%c21] : memref<98xf32, #tpu.memory_space<smem>>
      %c22 = arith.constant 22 : index
      %49 = memref.load %arg2[%c22] : memref<98xf32, #tpu.memory_space<smem>>
      %c23 = arith.constant 23 : index
      %50 = memref.load %arg2[%c23] : memref<98xf32, #tpu.memory_space<smem>>
      %c24 = arith.constant 24 : index
      %51 = memref.load %arg2[%c24] : memref<98xf32, #tpu.memory_space<smem>>
      %c25 = arith.constant 25 : index
      %52 = memref.load %arg2[%c25] : memref<98xf32, #tpu.memory_space<smem>>
      %c26 = arith.constant 26 : index
      %53 = memref.load %arg2[%c26] : memref<98xf32, #tpu.memory_space<smem>>
      %c27 = arith.constant 27 : index
      %54 = memref.load %arg2[%c27] : memref<98xf32, #tpu.memory_space<smem>>
      %c28 = arith.constant 28 : index
      %55 = memref.load %arg2[%c28] : memref<98xf32, #tpu.memory_space<smem>>
      %c29 = arith.constant 29 : index
      %56 = memref.load %arg2[%c29] : memref<98xf32, #tpu.memory_space<smem>>
      %c30 = arith.constant 30 : index
      %57 = memref.load %arg2[%c30] : memref<98xf32, #tpu.memory_space<smem>>
      %c31 = arith.constant 31 : index
      %58 = memref.load %arg2[%c31] : memref<98xf32, #tpu.memory_space<smem>>
      %c32 = arith.constant 32 : index
      %59 = memref.load %arg2[%c32] : memref<98xf32, #tpu.memory_space<smem>>
      %c33 = arith.constant 33 : index
      %60 = memref.load %arg2[%c33] : memref<98xf32, #tpu.memory_space<smem>>
      %c34 = arith.constant 34 : index
      %61 = memref.load %arg2[%c34] : memref<98xf32, #tpu.memory_space<smem>>
      %c35 = arith.constant 35 : index
      %62 = memref.load %arg2[%c35] : memref<98xf32, #tpu.memory_space<smem>>
      %c36 = arith.constant 36 : index
      %63 = memref.load %arg2[%c36] : memref<98xf32, #tpu.memory_space<smem>>
      %c37 = arith.constant 37 : index
      %64 = memref.load %arg2[%c37] : memref<98xf32, #tpu.memory_space<smem>>
      %c38 = arith.constant 38 : index
      %65 = memref.load %arg2[%c38] : memref<98xf32, #tpu.memory_space<smem>>
      %c39 = arith.constant 39 : index
      %66 = memref.load %arg2[%c39] : memref<98xf32, #tpu.memory_space<smem>>
      %c40 = arith.constant 40 : index
      %67 = memref.load %arg2[%c40] : memref<98xf32, #tpu.memory_space<smem>>
      %c41 = arith.constant 41 : index
      %68 = memref.load %arg2[%c41] : memref<98xf32, #tpu.memory_space<smem>>
      %c42 = arith.constant 42 : index
      %69 = memref.load %arg2[%c42] : memref<98xf32, #tpu.memory_space<smem>>
      %c43 = arith.constant 43 : index
      %70 = memref.load %arg2[%c43] : memref<98xf32, #tpu.memory_space<smem>>
      %c44 = arith.constant 44 : index
      %71 = memref.load %arg2[%c44] : memref<98xf32, #tpu.memory_space<smem>>
      %c45 = arith.constant 45 : index
      %72 = memref.load %arg2[%c45] : memref<98xf32, #tpu.memory_space<smem>>
      %c46 = arith.constant 46 : index
      %73 = memref.load %arg2[%c46] : memref<98xf32, #tpu.memory_space<smem>>
      %c47 = arith.constant 47 : index
      %74 = memref.load %arg2[%c47] : memref<98xf32, #tpu.memory_space<smem>>
      %c48 = arith.constant 48 : index
      %75 = memref.load %arg2[%c48] : memref<98xf32, #tpu.memory_space<smem>>
      %c49 = arith.constant 49 : index
      %76 = memref.load %arg2[%c49] : memref<98xf32, #tpu.memory_space<smem>>
      %c50 = arith.constant 50 : index
      %77 = memref.load %arg2[%c50] : memref<98xf32, #tpu.memory_space<smem>>
      %c51 = arith.constant 51 : index
      %78 = memref.load %arg2[%c51] : memref<98xf32, #tpu.memory_space<smem>>
      %c52 = arith.constant 52 : index
      %79 = memref.load %arg2[%c52] : memref<98xf32, #tpu.memory_space<smem>>
      %c53 = arith.constant 53 : index
      %80 = memref.load %arg2[%c53] : memref<98xf32, #tpu.memory_space<smem>>
      %c54 = arith.constant 54 : index
      %81 = memref.load %arg2[%c54] : memref<98xf32, #tpu.memory_space<smem>>
      %c55 = arith.constant 55 : index
      %82 = memref.load %arg2[%c55] : memref<98xf32, #tpu.memory_space<smem>>
      %c56 = arith.constant 56 : index
      %83 = memref.load %arg2[%c56] : memref<98xf32, #tpu.memory_space<smem>>
      %c57 = arith.constant 57 : index
      %84 = memref.load %arg2[%c57] : memref<98xf32, #tpu.memory_space<smem>>
      %c58 = arith.constant 58 : index
      %85 = memref.load %arg2[%c58] : memref<98xf32, #tpu.memory_space<smem>>
      %c59 = arith.constant 59 : index
      %86 = memref.load %arg2[%c59] : memref<98xf32, #tpu.memory_space<smem>>
      %c60 = arith.constant 60 : index
      %87 = memref.load %arg2[%c60] : memref<98xf32, #tpu.memory_space<smem>>
      %c61 = arith.constant 61 : index
      %88 = memref.load %arg2[%c61] : memref<98xf32, #tpu.memory_space<smem>>
      %c62 = arith.constant 62 : index
      %89 = memref.load %arg2[%c62] : memref<98xf32, #tpu.memory_space<smem>>
      %c63 = arith.constant 63 : index
      %90 = memref.load %arg2[%c63] : memref<98xf32, #tpu.memory_space<smem>>
      %c64 = arith.constant 64 : index
      %91 = memref.load %arg2[%c64] : memref<98xf32, #tpu.memory_space<smem>>
      %c65 = arith.constant 65 : index
      %92 = memref.load %arg2[%c65] : memref<98xf32, #tpu.memory_space<smem>>
      %c66 = arith.constant 66 : index
      %93 = memref.load %arg2[%c66] : memref<98xf32, #tpu.memory_space<smem>>
      %c67 = arith.constant 67 : index
      %94 = memref.load %arg2[%c67] : memref<98xf32, #tpu.memory_space<smem>>
      %c68 = arith.constant 68 : index
      %95 = memref.load %arg2[%c68] : memref<98xf32, #tpu.memory_space<smem>>
      %c69 = arith.constant 69 : index
      %96 = memref.load %arg2[%c69] : memref<98xf32, #tpu.memory_space<smem>>
      %c70 = arith.constant 70 : index
      %97 = memref.load %arg2[%c70] : memref<98xf32, #tpu.memory_space<smem>>
      %c71 = arith.constant 71 : index
      %98 = memref.load %arg2[%c71] : memref<98xf32, #tpu.memory_space<smem>>
      %c72 = arith.constant 72 : index
      %99 = memref.load %arg2[%c72] : memref<98xf32, #tpu.memory_space<smem>>
      %c73 = arith.constant 73 : index
      %100 = memref.load %arg2[%c73] : memref<98xf32, #tpu.memory_space<smem>>
      %c74 = arith.constant 74 : index
      %101 = memref.load %arg2[%c74] : memref<98xf32, #tpu.memory_space<smem>>
      %c75 = arith.constant 75 : index
      %102 = memref.load %arg2[%c75] : memref<98xf32, #tpu.memory_space<smem>>
      %c76 = arith.constant 76 : index
      %103 = memref.load %arg2[%c76] : memref<98xf32, #tpu.memory_space<smem>>
      %c77 = arith.constant 77 : index
      %104 = memref.load %arg2[%c77] : memref<98xf32, #tpu.memory_space<smem>>
      %c78 = arith.constant 78 : index
      %105 = memref.load %arg2[%c78] : memref<98xf32, #tpu.memory_space<smem>>
      %c79 = arith.constant 79 : index
      %106 = memref.load %arg2[%c79] : memref<98xf32, #tpu.memory_space<smem>>
      %c80 = arith.constant 80 : index
      %107 = memref.load %arg2[%c80] : memref<98xf32, #tpu.memory_space<smem>>
      %c81 = arith.constant 81 : index
      %108 = memref.load %arg2[%c81] : memref<98xf32, #tpu.memory_space<smem>>
      %c82 = arith.constant 82 : index
      %109 = memref.load %arg2[%c82] : memref<98xf32, #tpu.memory_space<smem>>
      %c83 = arith.constant 83 : index
      %110 = memref.load %arg2[%c83] : memref<98xf32, #tpu.memory_space<smem>>
      %c84 = arith.constant 84 : index
      %111 = memref.load %arg2[%c84] : memref<98xf32, #tpu.memory_space<smem>>
      %c85 = arith.constant 85 : index
      %112 = memref.load %arg2[%c85] : memref<98xf32, #tpu.memory_space<smem>>
      %c86 = arith.constant 86 : index
      %113 = memref.load %arg2[%c86] : memref<98xf32, #tpu.memory_space<smem>>
      %c87 = arith.constant 87 : index
      %114 = memref.load %arg2[%c87] : memref<98xf32, #tpu.memory_space<smem>>
      %c88 = arith.constant 88 : index
      %115 = memref.load %arg2[%c88] : memref<98xf32, #tpu.memory_space<smem>>
      %c89 = arith.constant 89 : index
      %116 = memref.load %arg2[%c89] : memref<98xf32, #tpu.memory_space<smem>>
      %c90 = arith.constant 90 : index
      %117 = memref.load %arg2[%c90] : memref<98xf32, #tpu.memory_space<smem>>
      %c91 = arith.constant 91 : index
      %118 = memref.load %arg2[%c91] : memref<98xf32, #tpu.memory_space<smem>>
      %c92 = arith.constant 92 : index
      %119 = memref.load %arg2[%c92] : memref<98xf32, #tpu.memory_space<smem>>
      %c93 = arith.constant 93 : index
      %120 = memref.load %arg2[%c93] : memref<98xf32, #tpu.memory_space<smem>>
      %c94 = arith.constant 94 : index
      %121 = memref.load %arg2[%c94] : memref<98xf32, #tpu.memory_space<smem>>
      %c95 = arith.constant 95 : index
      %122 = memref.load %arg2[%c95] : memref<98xf32, #tpu.memory_space<smem>>
      %c96 = arith.constant 96 : index
      %123 = memref.load %arg2[%c96] : memref<98xf32, #tpu.memory_space<smem>>
      %c97 = arith.constant 97 : index
      %124 = memref.load %arg2[%c97] : memref<98xf32, #tpu.memory_space<smem>>
      %cst_21 = arith.constant 0.000000e+00 : f32
      %125 = vector.broadcast %cst_21 : f32 to vector<1x352xf32>
      %cst_22 = arith.constant 0.000000e+00 : f32
      %126 = vector.broadcast %cst_22 : f32 to vector<1x352xf32>
      %cst_23 = arith.constant 0.000000e+00 : f32
      %127 = vector.broadcast %cst_23 : f32 to vector<1x352xf32>
      %cst_24 = arith.constant 0.000000e+00 : f32
      %128 = vector.broadcast %cst_24 : f32 to vector<1x352xf32>
      %129 = vector.extract_strided_slice %25 {offsets = [0, 62], sizes = [1, 352], strides = [1, 1]} : vector<1x640xf32> to vector<1x352xf32>
      %130 = vector.broadcast %27 : f32 to vector<1x352xf32>
      %131 = arith.mulf %130, %129 : vector<1x352xf32>
      %132 = arith.addf %125, %131 : vector<1x352xf32>
      %133 = vector.extract_strided_slice %26 {offsets = [0, 62], sizes = [1, 352], strides = [1, 1]} : vector<1x640xf32> to vector<1x352xf32>
      %134 = vector.broadcast %76 : f32 to vector<1x352xf32>
      %135 = arith.mulf %134, %133 : vector<1x352xf32>
      %136 = arith.addf %132, %135 : vector<1x352xf32>
      %137 = vector.extract_strided_slice %25 {offsets = [0, 63], sizes = [1, 352], strides = [1, 1]} : vector<1x640xf32> to vector<1x352xf32>
      %138 = vector.broadcast %28 : f32 to vector<1x352xf32>
      %139 = arith.mulf %138, %137 : vector<1x352xf32>
      %140 = arith.addf %126, %139 : vector<1x352xf32>
      %141 = vector.extract_strided_slice %26 {offsets = [0, 63], sizes = [1, 352], strides = [1, 1]} : vector<1x640xf32> to vector<1x352xf32>
      %142 = vector.broadcast %77 : f32 to vector<1x352xf32>
      %143 = arith.mulf %142, %141 : vector<1x352xf32>
      %144 = arith.addf %140, %143 : vector<1x352xf32>
      %145 = vector.extract_strided_slice %25 {offsets = [0, 64], sizes = [1, 352], strides = [1, 1]} : vector<1x640xf32> to vector<1x352xf32>
      %146 = vector.broadcast %29 : f32 to vector<1x352xf32>
      %147 = arith.mulf %146, %145 : vector<1x352xf32>
      %148 = arith.addf %127, %147 : vector<1x352xf32>
      %149 = vector.extract_strided_slice %26 {offsets = [0, 64], sizes = [1, 352], strides = [1, 1]} : vector<1x640xf32> to vector<1x352xf32>
      %150 = vector.broadcast %78 : f32 to vector<1x352xf32>
      %151 = arith.mulf %150, %149 : vector<1x352xf32>
      %152 = arith.addf %148, %151 : vector<1x352xf32>
      %153 = vector.extract_strided_slice %25 {offsets = [0, 65], sizes = [1, 352], strides = [1, 1]} : vector<1x640xf32> to vector<1x352xf32>
      %154 = vector.broadcast %30 : f32 to vector<1x352xf32>
      %155 = arith.mulf %154, %153 : vector<1x352xf32>
      %156 = arith.addf %128, %155 : vector<1x352xf32>
      %157 = vector.extract_strided_slice %26 {offsets = [0, 65], sizes = [1, 352], strides = [1, 1]} : vector<1x640xf32> to vector<1x352xf32>
      %158 = vector.broadcast %79 : f32 to vector<1x352xf32>
      %159 = arith.mulf %158, %157 : vector<1x352xf32>
      %160 = arith.addf %156, %159 : vector<1x352xf32>
      %161 = vector.extract_strided_slice %25 {offsets = [0, 66], sizes = [1, 352], strides = [1, 1]} : vector<1x640xf32> to vector<1x352xf32>
      %162 = vector.broadcast %31 : f32 to vector<1x352xf32>
      %163 = arith.mulf %162, %161 : vector<1x352xf32>
      %164 = arith.addf %136, %163 : vector<1x352xf32>
      %165 = vector.extract_strided_slice %26 {offsets = [0, 66], sizes = [1, 352], strides = [1, 1]} : vector<1x640xf32> to vector<1x352xf32>
      %166 = vector.broadcast %80 : f32 to vector<1x352xf32>
      %167 = arith.mulf %166, %165 : vector<1x352xf32>
      %168 = arith.addf %164, %167 : vector<1x352xf32>
      %169 = vector.extract_strided_slice %25 {offsets = [0, 67], sizes = [1, 352], strides = [1, 1]} : vector<1x640xf32> to vector<1x352xf32>
      %170 = vector.broadcast %32 : f32 to vector<1x352xf32>
      %171 = arith.mulf %170, %169 : vector<1x352xf32>
      %172 = arith.addf %144, %171 : vector<1x352xf32>
      %173 = vector.extract_strided_slice %26 {offsets = [0, 67], sizes = [1, 352], strides = [1, 1]} : vector<1x640xf32> to vector<1x352xf32>
      %174 = vector.broadcast %81 : f32 to vector<1x352xf32>
      %175 = arith.mulf %174, %173 : vector<1x352xf32>
      %176 = arith.addf %172, %175 : vector<1x352xf32>
      %177 = vector.extract_strided_slice %25 {offsets = [0, 68], sizes = [1, 352], strides = [1, 1]} : vector<1x640xf32> to vector<1x352xf32>
      %178 = vector.broadcast %33 : f32 to vector<1x352xf32>
      %179 = arith.mulf %178, %177 : vector<1x352xf32>
      %180 = arith.addf %152, %179 : vector<1x352xf32>
      %181 = vector.extract_strided_slice %26 {offsets = [0, 68], sizes = [1, 352], strides = [1, 1]} : vector<1x640xf32> to vector<1x352xf32>
      %182 = vector.broadcast %82 : f32 to vector<1x352xf32>
      %183 = arith.mulf %182, %181 : vector<1x352xf32>
      %184 = arith.addf %180, %183 : vector<1x352xf32>
      %185 = vector.extract_strided_slice %25 {offsets = [0, 84], sizes = [1, 352], strides = [1, 1]} : vector<1x640xf32> to vector<1x352xf32>
      %186 = vector.broadcast %34 : f32 to vector<1x352xf32>
      %187 = arith.mulf %186, %185 : vector<1x352xf32>
      %188 = arith.addf %160, %187 : vector<1x352xf32>
      %189 = vector.extract_strided_slice %26 {offsets = [0, 84], sizes = [1, 352], strides = [1, 1]} : vector<1x640xf32> to vector<1x352xf32>
      %190 = vector.broadcast %83 : f32 to vector<1x352xf32>
      %191 = arith.mulf %190, %189 : vector<1x352xf32>
      %192 = arith.addf %188, %191 : vector<1x352xf32>
      %193 = vector.extract_strided_slice %25 {offsets = [0, 85], sizes = [1, 352], strides = [1, 1]} : vector<1x640xf32> to vector<1x352xf32>
      %194 = vector.broadcast %35 : f32 to vector<1x352xf32>
      %195 = arith.mulf %194, %193 : vector<1x352xf32>
      %196 = arith.addf %168, %195 : vector<1x352xf32>
      %197 = vector.extract_strided_slice %26 {offsets = [0, 85], sizes = [1, 352], strides = [1, 1]} : vector<1x640xf32> to vector<1x352xf32>
      %198 = vector.broadcast %84 : f32 to vector<1x352xf32>
      %199 = arith.mulf %198, %197 : vector<1x352xf32>
      %200 = arith.addf %196, %199 : vector<1x352xf32>
      %201 = vector.extract_strided_slice %25 {offsets = [0, 86], sizes = [1, 352], strides = [1, 1]} : vector<1x640xf32> to vector<1x352xf32>
      %202 = vector.broadcast %36 : f32 to vector<1x352xf32>
      %203 = arith.mulf %202, %201 : vector<1x352xf32>
      %204 = arith.addf %176, %203 : vector<1x352xf32>
      %205 = vector.extract_strided_slice %26 {offsets = [0, 86], sizes = [1, 352], strides = [1, 1]} : vector<1x640xf32> to vector<1x352xf32>
      %206 = vector.broadcast %85 : f32 to vector<1x352xf32>
      %207 = arith.mulf %206, %205 : vector<1x352xf32>
      %208 = arith.addf %204, %207 : vector<1x352xf32>
      %209 = vector.extract_strided_slice %25 {offsets = [0, 87], sizes = [1, 352], strides = [1, 1]} : vector<1x640xf32> to vector<1x352xf32>
      %210 = vector.broadcast %37 : f32 to vector<1x352xf32>
      %211 = arith.mulf %210, %209 : vector<1x352xf32>
      %212 = arith.addf %184, %211 : vector<1x352xf32>
      %213 = vector.extract_strided_slice %26 {offsets = [0, 87], sizes = [1, 352], strides = [1, 1]} : vector<1x640xf32> to vector<1x352xf32>
      %214 = vector.broadcast %86 : f32 to vector<1x352xf32>
      %215 = arith.mulf %214, %213 : vector<1x352xf32>
      %216 = arith.addf %212, %215 : vector<1x352xf32>
      %217 = vector.extract_strided_slice %25 {offsets = [0, 88], sizes = [1, 352], strides = [1, 1]} : vector<1x640xf32> to vector<1x352xf32>
      %218 = vector.broadcast %38 : f32 to vector<1x352xf32>
      %219 = arith.mulf %218, %217 : vector<1x352xf32>
      %220 = arith.addf %192, %219 : vector<1x352xf32>
      %221 = vector.extract_strided_slice %26 {offsets = [0, 88], sizes = [1, 352], strides = [1, 1]} : vector<1x640xf32> to vector<1x352xf32>
      %222 = vector.broadcast %87 : f32 to vector<1x352xf32>
      %223 = arith.mulf %222, %221 : vector<1x352xf32>
      %224 = arith.addf %220, %223 : vector<1x352xf32>
      %225 = vector.extract_strided_slice %25 {offsets = [0, 89], sizes = [1, 352], strides = [1, 1]} : vector<1x640xf32> to vector<1x352xf32>
      %226 = vector.broadcast %39 : f32 to vector<1x352xf32>
      %227 = arith.mulf %226, %225 : vector<1x352xf32>
      %228 = arith.addf %200, %227 : vector<1x352xf32>
      %229 = vector.extract_strided_slice %26 {offsets = [0, 89], sizes = [1, 352], strides = [1, 1]} : vector<1x640xf32> to vector<1x352xf32>
      %230 = vector.broadcast %88 : f32 to vector<1x352xf32>
      %231 = arith.mulf %230, %229 : vector<1x352xf32>
      %232 = arith.addf %228, %231 : vector<1x352xf32>
      %233 = vector.extract_strided_slice %25 {offsets = [0, 90], sizes = [1, 352], strides = [1, 1]} : vector<1x640xf32> to vector<1x352xf32>
      %234 = vector.broadcast %40 : f32 to vector<1x352xf32>
      %235 = arith.mulf %234, %233 : vector<1x352xf32>
      %236 = arith.addf %208, %235 : vector<1x352xf32>
      %237 = vector.extract_strided_slice %26 {offsets = [0, 90], sizes = [1, 352], strides = [1, 1]} : vector<1x640xf32> to vector<1x352xf32>
      %238 = vector.broadcast %89 : f32 to vector<1x352xf32>
      %239 = arith.mulf %238, %237 : vector<1x352xf32>
      %240 = arith.addf %236, %239 : vector<1x352xf32>
      %241 = vector.extract_strided_slice %25 {offsets = [0, 106], sizes = [1, 352], strides = [1, 1]} : vector<1x640xf32> to vector<1x352xf32>
      %242 = vector.broadcast %41 : f32 to vector<1x352xf32>
      %243 = arith.mulf %242, %241 : vector<1x352xf32>
      %244 = arith.addf %216, %243 : vector<1x352xf32>
      %245 = vector.extract_strided_slice %26 {offsets = [0, 106], sizes = [1, 352], strides = [1, 1]} : vector<1x640xf32> to vector<1x352xf32>
      %246 = vector.broadcast %90 : f32 to vector<1x352xf32>
      %247 = arith.mulf %246, %245 : vector<1x352xf32>
      %248 = arith.addf %244, %247 : vector<1x352xf32>
      %249 = vector.extract_strided_slice %25 {offsets = [0, 107], sizes = [1, 352], strides = [1, 1]} : vector<1x640xf32> to vector<1x352xf32>
      %250 = vector.broadcast %42 : f32 to vector<1x352xf32>
      %251 = arith.mulf %250, %249 : vector<1x352xf32>
      %252 = arith.addf %224, %251 : vector<1x352xf32>
      %253 = vector.extract_strided_slice %26 {offsets = [0, 107], sizes = [1, 352], strides = [1, 1]} : vector<1x640xf32> to vector<1x352xf32>
      %254 = vector.broadcast %91 : f32 to vector<1x352xf32>
      %255 = arith.mulf %254, %253 : vector<1x352xf32>
      %256 = arith.addf %252, %255 : vector<1x352xf32>
      %257 = vector.extract_strided_slice %25 {offsets = [0, 108], sizes = [1, 352], strides = [1, 1]} : vector<1x640xf32> to vector<1x352xf32>
      %258 = vector.broadcast %43 : f32 to vector<1x352xf32>
      %259 = arith.mulf %258, %257 : vector<1x352xf32>
      %260 = arith.addf %232, %259 : vector<1x352xf32>
      %261 = vector.extract_strided_slice %26 {offsets = [0, 108], sizes = [1, 352], strides = [1, 1]} : vector<1x640xf32> to vector<1x352xf32>
      %262 = vector.broadcast %92 : f32 to vector<1x352xf32>
      %263 = arith.mulf %262, %261 : vector<1x352xf32>
      %264 = arith.addf %260, %263 : vector<1x352xf32>
      %265 = vector.extract_strided_slice %25 {offsets = [0, 109], sizes = [1, 352], strides = [1, 1]} : vector<1x640xf32> to vector<1x352xf32>
      %266 = vector.broadcast %44 : f32 to vector<1x352xf32>
      %267 = arith.mulf %266, %265 : vector<1x352xf32>
      %268 = arith.addf %240, %267 : vector<1x352xf32>
      %269 = vector.extract_strided_slice %26 {offsets = [0, 109], sizes = [1, 352], strides = [1, 1]} : vector<1x640xf32> to vector<1x352xf32>
      %270 = vector.broadcast %93 : f32 to vector<1x352xf32>
      %271 = arith.mulf %270, %269 : vector<1x352xf32>
      %272 = arith.addf %268, %271 : vector<1x352xf32>
      %273 = vector.extract_strided_slice %25 {offsets = [0, 110], sizes = [1, 352], strides = [1, 1]} : vector<1x640xf32> to vector<1x352xf32>
      %274 = vector.broadcast %45 : f32 to vector<1x352xf32>
      %275 = arith.mulf %274, %273 : vector<1x352xf32>
      %276 = arith.addf %248, %275 : vector<1x352xf32>
      %277 = vector.extract_strided_slice %26 {offsets = [0, 110], sizes = [1, 352], strides = [1, 1]} : vector<1x640xf32> to vector<1x352xf32>
      %278 = vector.broadcast %94 : f32 to vector<1x352xf32>
      %279 = arith.mulf %278, %277 : vector<1x352xf32>
      %280 = arith.addf %276, %279 : vector<1x352xf32>
      %281 = vector.extract_strided_slice %25 {offsets = [0, 111], sizes = [1, 352], strides = [1, 1]} : vector<1x640xf32> to vector<1x352xf32>
      %282 = vector.broadcast %46 : f32 to vector<1x352xf32>
      %283 = arith.mulf %282, %281 : vector<1x352xf32>
      %284 = arith.addf %256, %283 : vector<1x352xf32>
      %285 = vector.extract_strided_slice %26 {offsets = [0, 111], sizes = [1, 352], strides = [1, 1]} : vector<1x640xf32> to vector<1x352xf32>
      %286 = vector.broadcast %95 : f32 to vector<1x352xf32>
      %287 = arith.mulf %286, %285 : vector<1x352xf32>
      %288 = arith.addf %284, %287 : vector<1x352xf32>
      %289 = vector.extract_strided_slice %25 {offsets = [0, 112], sizes = [1, 352], strides = [1, 1]} : vector<1x640xf32> to vector<1x352xf32>
      %290 = vector.broadcast %47 : f32 to vector<1x352xf32>
      %291 = arith.mulf %290, %289 : vector<1x352xf32>
      %292 = arith.addf %264, %291 : vector<1x352xf32>
      %293 = vector.extract_strided_slice %26 {offsets = [0, 112], sizes = [1, 352], strides = [1, 1]} : vector<1x640xf32> to vector<1x352xf32>
      %294 = vector.broadcast %96 : f32 to vector<1x352xf32>
      %295 = arith.mulf %294, %293 : vector<1x352xf32>
      %296 = arith.addf %292, %295 : vector<1x352xf32>
      %297 = vector.extract_strided_slice %25 {offsets = [0, 128], sizes = [1, 352], strides = [1, 1]} : vector<1x640xf32> to vector<1x352xf32>
      %298 = vector.broadcast %48 : f32 to vector<1x352xf32>
      %299 = arith.mulf %298, %297 : vector<1x352xf32>
      %300 = arith.addf %272, %299 : vector<1x352xf32>
      %301 = vector.extract_strided_slice %26 {offsets = [0, 128], sizes = [1, 352], strides = [1, 1]} : vector<1x640xf32> to vector<1x352xf32>
      %302 = vector.broadcast %97 : f32 to vector<1x352xf32>
      %303 = arith.mulf %302, %301 : vector<1x352xf32>
      %304 = arith.addf %300, %303 : vector<1x352xf32>
      %305 = vector.extract_strided_slice %25 {offsets = [0, 129], sizes = [1, 352], strides = [1, 1]} : vector<1x640xf32> to vector<1x352xf32>
      %306 = vector.broadcast %49 : f32 to vector<1x352xf32>
      %307 = arith.mulf %306, %305 : vector<1x352xf32>
      %308 = arith.addf %280, %307 : vector<1x352xf32>
      %309 = vector.extract_strided_slice %26 {offsets = [0, 129], sizes = [1, 352], strides = [1, 1]} : vector<1x640xf32> to vector<1x352xf32>
      %310 = vector.broadcast %98 : f32 to vector<1x352xf32>
      %311 = arith.mulf %310, %309 : vector<1x352xf32>
      %312 = arith.addf %308, %311 : vector<1x352xf32>
      %313 = vector.extract_strided_slice %25 {offsets = [0, 130], sizes = [1, 352], strides = [1, 1]} : vector<1x640xf32> to vector<1x352xf32>
      %314 = vector.broadcast %50 : f32 to vector<1x352xf32>
      %315 = arith.mulf %314, %313 : vector<1x352xf32>
      %316 = arith.addf %288, %315 : vector<1x352xf32>
      %317 = vector.extract_strided_slice %26 {offsets = [0, 130], sizes = [1, 352], strides = [1, 1]} : vector<1x640xf32> to vector<1x352xf32>
      %318 = vector.broadcast %99 : f32 to vector<1x352xf32>
      %319 = arith.mulf %318, %317 : vector<1x352xf32>
      %320 = arith.addf %316, %319 : vector<1x352xf32>
      %321 = vector.extract_strided_slice %25 {offsets = [0, 131], sizes = [1, 352], strides = [1, 1]} : vector<1x640xf32> to vector<1x352xf32>
      %322 = vector.broadcast %51 : f32 to vector<1x352xf32>
      %323 = arith.mulf %322, %321 : vector<1x352xf32>
      %324 = arith.addf %296, %323 : vector<1x352xf32>
      %325 = vector.extract_strided_slice %26 {offsets = [0, 131], sizes = [1, 352], strides = [1, 1]} : vector<1x640xf32> to vector<1x352xf32>
      %326 = vector.broadcast %100 : f32 to vector<1x352xf32>
      %327 = arith.mulf %326, %325 : vector<1x352xf32>
      %328 = arith.addf %324, %327 : vector<1x352xf32>
      %329 = vector.extract_strided_slice %25 {offsets = [0, 132], sizes = [1, 352], strides = [1, 1]} : vector<1x640xf32> to vector<1x352xf32>
      %330 = vector.broadcast %52 : f32 to vector<1x352xf32>
      %331 = arith.mulf %330, %329 : vector<1x352xf32>
      %332 = arith.addf %304, %331 : vector<1x352xf32>
      %333 = vector.extract_strided_slice %26 {offsets = [0, 132], sizes = [1, 352], strides = [1, 1]} : vector<1x640xf32> to vector<1x352xf32>
      %334 = vector.broadcast %101 : f32 to vector<1x352xf32>
      %335 = arith.mulf %334, %333 : vector<1x352xf32>
      %336 = arith.addf %332, %335 : vector<1x352xf32>
      %337 = vector.extract_strided_slice %25 {offsets = [0, 133], sizes = [1, 352], strides = [1, 1]} : vector<1x640xf32> to vector<1x352xf32>
      %338 = vector.broadcast %53 : f32 to vector<1x352xf32>
      %339 = arith.mulf %338, %337 : vector<1x352xf32>
      %340 = arith.addf %312, %339 : vector<1x352xf32>
      %341 = vector.extract_strided_slice %26 {offsets = [0, 133], sizes = [1, 352], strides = [1, 1]} : vector<1x640xf32> to vector<1x352xf32>
      %342 = vector.broadcast %102 : f32 to vector<1x352xf32>
      %343 = arith.mulf %342, %341 : vector<1x352xf32>
      %344 = arith.addf %340, %343 : vector<1x352xf32>
      %345 = vector.extract_strided_slice %25 {offsets = [0, 134], sizes = [1, 352], strides = [1, 1]} : vector<1x640xf32> to vector<1x352xf32>
      %346 = vector.broadcast %54 : f32 to vector<1x352xf32>
      %347 = arith.mulf %346, %345 : vector<1x352xf32>
      %348 = arith.addf %320, %347 : vector<1x352xf32>
      %349 = vector.extract_strided_slice %26 {offsets = [0, 134], sizes = [1, 352], strides = [1, 1]} : vector<1x640xf32> to vector<1x352xf32>
      %350 = vector.broadcast %103 : f32 to vector<1x352xf32>
      %351 = arith.mulf %350, %349 : vector<1x352xf32>
      %352 = arith.addf %348, %351 : vector<1x352xf32>
      %353 = vector.extract_strided_slice %25 {offsets = [0, 150], sizes = [1, 352], strides = [1, 1]} : vector<1x640xf32> to vector<1x352xf32>
      %354 = vector.broadcast %55 : f32 to vector<1x352xf32>
      %355 = arith.mulf %354, %353 : vector<1x352xf32>
      %356 = arith.addf %328, %355 : vector<1x352xf32>
      %357 = vector.extract_strided_slice %26 {offsets = [0, 150], sizes = [1, 352], strides = [1, 1]} : vector<1x640xf32> to vector<1x352xf32>
      %358 = vector.broadcast %104 : f32 to vector<1x352xf32>
      %359 = arith.mulf %358, %357 : vector<1x352xf32>
      %360 = arith.addf %356, %359 : vector<1x352xf32>
      %361 = vector.extract_strided_slice %25 {offsets = [0, 151], sizes = [1, 352], strides = [1, 1]} : vector<1x640xf32> to vector<1x352xf32>
      %362 = vector.broadcast %56 : f32 to vector<1x352xf32>
      %363 = arith.mulf %362, %361 : vector<1x352xf32>
      %364 = arith.addf %336, %363 : vector<1x352xf32>
      %365 = vector.extract_strided_slice %26 {offsets = [0, 151], sizes = [1, 352], strides = [1, 1]} : vector<1x640xf32> to vector<1x352xf32>
      %366 = vector.broadcast %105 : f32 to vector<1x352xf32>
      %367 = arith.mulf %366, %365 : vector<1x352xf32>
      %368 = arith.addf %364, %367 : vector<1x352xf32>
      %369 = vector.extract_strided_slice %25 {offsets = [0, 152], sizes = [1, 352], strides = [1, 1]} : vector<1x640xf32> to vector<1x352xf32>
      %370 = vector.broadcast %57 : f32 to vector<1x352xf32>
      %371 = arith.mulf %370, %369 : vector<1x352xf32>
      %372 = arith.addf %344, %371 : vector<1x352xf32>
      %373 = vector.extract_strided_slice %26 {offsets = [0, 152], sizes = [1, 352], strides = [1, 1]} : vector<1x640xf32> to vector<1x352xf32>
      %374 = vector.broadcast %106 : f32 to vector<1x352xf32>
      %375 = arith.mulf %374, %373 : vector<1x352xf32>
      %376 = arith.addf %372, %375 : vector<1x352xf32>
      %377 = vector.extract_strided_slice %25 {offsets = [0, 153], sizes = [1, 352], strides = [1, 1]} : vector<1x640xf32> to vector<1x352xf32>
      %378 = vector.broadcast %58 : f32 to vector<1x352xf32>
      %379 = arith.mulf %378, %377 : vector<1x352xf32>
      %380 = arith.addf %352, %379 : vector<1x352xf32>
      %381 = vector.extract_strided_slice %26 {offsets = [0, 153], sizes = [1, 352], strides = [1, 1]} : vector<1x640xf32> to vector<1x352xf32>
      %382 = vector.broadcast %107 : f32 to vector<1x352xf32>
      %383 = arith.mulf %382, %381 : vector<1x352xf32>
      %384 = arith.addf %380, %383 : vector<1x352xf32>
      %385 = vector.extract_strided_slice %25 {offsets = [0, 154], sizes = [1, 352], strides = [1, 1]} : vector<1x640xf32> to vector<1x352xf32>
      %386 = vector.broadcast %59 : f32 to vector<1x352xf32>
      %387 = arith.mulf %386, %385 : vector<1x352xf32>
      %388 = arith.addf %360, %387 : vector<1x352xf32>
      %389 = vector.extract_strided_slice %26 {offsets = [0, 154], sizes = [1, 352], strides = [1, 1]} : vector<1x640xf32> to vector<1x352xf32>
      %390 = vector.broadcast %108 : f32 to vector<1x352xf32>
      %391 = arith.mulf %390, %389 : vector<1x352xf32>
      %392 = arith.addf %388, %391 : vector<1x352xf32>
      %393 = vector.extract_strided_slice %25 {offsets = [0, 155], sizes = [1, 352], strides = [1, 1]} : vector<1x640xf32> to vector<1x352xf32>
      %394 = vector.broadcast %60 : f32 to vector<1x352xf32>
      %395 = arith.mulf %394, %393 : vector<1x352xf32>
      %396 = arith.addf %368, %395 : vector<1x352xf32>
      %397 = vector.extract_strided_slice %26 {offsets = [0, 155], sizes = [1, 352], strides = [1, 1]} : vector<1x640xf32> to vector<1x352xf32>
      %398 = vector.broadcast %109 : f32 to vector<1x352xf32>
      %399 = arith.mulf %398, %397 : vector<1x352xf32>
      %400 = arith.addf %396, %399 : vector<1x352xf32>
      %401 = vector.extract_strided_slice %25 {offsets = [0, 156], sizes = [1, 352], strides = [1, 1]} : vector<1x640xf32> to vector<1x352xf32>
      %402 = vector.broadcast %61 : f32 to vector<1x352xf32>
      %403 = arith.mulf %402, %401 : vector<1x352xf32>
      %404 = arith.addf %376, %403 : vector<1x352xf32>
      %405 = vector.extract_strided_slice %26 {offsets = [0, 156], sizes = [1, 352], strides = [1, 1]} : vector<1x640xf32> to vector<1x352xf32>
      %406 = vector.broadcast %110 : f32 to vector<1x352xf32>
      %407 = arith.mulf %406, %405 : vector<1x352xf32>
      %408 = arith.addf %404, %407 : vector<1x352xf32>
      %409 = vector.extract_strided_slice %25 {offsets = [0, 172], sizes = [1, 352], strides = [1, 1]} : vector<1x640xf32> to vector<1x352xf32>
      %410 = vector.broadcast %62 : f32 to vector<1x352xf32>
      %411 = arith.mulf %410, %409 : vector<1x352xf32>
      %412 = arith.addf %384, %411 : vector<1x352xf32>
      %413 = vector.extract_strided_slice %26 {offsets = [0, 172], sizes = [1, 352], strides = [1, 1]} : vector<1x640xf32> to vector<1x352xf32>
      %414 = vector.broadcast %111 : f32 to vector<1x352xf32>
      %415 = arith.mulf %414, %413 : vector<1x352xf32>
      %416 = arith.addf %412, %415 : vector<1x352xf32>
      %417 = vector.extract_strided_slice %25 {offsets = [0, 173], sizes = [1, 352], strides = [1, 1]} : vector<1x640xf32> to vector<1x352xf32>
      %418 = vector.broadcast %63 : f32 to vector<1x352xf32>
      %419 = arith.mulf %418, %417 : vector<1x352xf32>
      %420 = arith.addf %392, %419 : vector<1x352xf32>
      %421 = vector.extract_strided_slice %26 {offsets = [0, 173], sizes = [1, 352], strides = [1, 1]} : vector<1x640xf32> to vector<1x352xf32>
      %422 = vector.broadcast %112 : f32 to vector<1x352xf32>
      %423 = arith.mulf %422, %421 : vector<1x352xf32>
      %424 = arith.addf %420, %423 : vector<1x352xf32>
      %425 = vector.extract_strided_slice %25 {offsets = [0, 174], sizes = [1, 352], strides = [1, 1]} : vector<1x640xf32> to vector<1x352xf32>
      %426 = vector.broadcast %64 : f32 to vector<1x352xf32>
      %427 = arith.mulf %426, %425 : vector<1x352xf32>
      %428 = arith.addf %400, %427 : vector<1x352xf32>
      %429 = vector.extract_strided_slice %26 {offsets = [0, 174], sizes = [1, 352], strides = [1, 1]} : vector<1x640xf32> to vector<1x352xf32>
      %430 = vector.broadcast %113 : f32 to vector<1x352xf32>
      %431 = arith.mulf %430, %429 : vector<1x352xf32>
      %432 = arith.addf %428, %431 : vector<1x352xf32>
      %433 = vector.extract_strided_slice %25 {offsets = [0, 175], sizes = [1, 352], strides = [1, 1]} : vector<1x640xf32> to vector<1x352xf32>
      %434 = vector.broadcast %65 : f32 to vector<1x352xf32>
      %435 = arith.mulf %434, %433 : vector<1x352xf32>
      %436 = arith.addf %408, %435 : vector<1x352xf32>
      %437 = vector.extract_strided_slice %26 {offsets = [0, 175], sizes = [1, 352], strides = [1, 1]} : vector<1x640xf32> to vector<1x352xf32>
      %438 = vector.broadcast %114 : f32 to vector<1x352xf32>
      %439 = arith.mulf %438, %437 : vector<1x352xf32>
      %440 = arith.addf %436, %439 : vector<1x352xf32>
      %441 = vector.extract_strided_slice %25 {offsets = [0, 176], sizes = [1, 352], strides = [1, 1]} : vector<1x640xf32> to vector<1x352xf32>
      %442 = vector.broadcast %66 : f32 to vector<1x352xf32>
      %443 = arith.mulf %442, %441 : vector<1x352xf32>
      %444 = arith.addf %416, %443 : vector<1x352xf32>
      %445 = vector.extract_strided_slice %26 {offsets = [0, 176], sizes = [1, 352], strides = [1, 1]} : vector<1x640xf32> to vector<1x352xf32>
      %446 = vector.broadcast %115 : f32 to vector<1x352xf32>
      %447 = arith.mulf %446, %445 : vector<1x352xf32>
      %448 = arith.addf %444, %447 : vector<1x352xf32>
      %449 = vector.extract_strided_slice %25 {offsets = [0, 177], sizes = [1, 352], strides = [1, 1]} : vector<1x640xf32> to vector<1x352xf32>
      %450 = vector.broadcast %67 : f32 to vector<1x352xf32>
      %451 = arith.mulf %450, %449 : vector<1x352xf32>
      %452 = arith.addf %424, %451 : vector<1x352xf32>
      %453 = vector.extract_strided_slice %26 {offsets = [0, 177], sizes = [1, 352], strides = [1, 1]} : vector<1x640xf32> to vector<1x352xf32>
      %454 = vector.broadcast %116 : f32 to vector<1x352xf32>
      %455 = arith.mulf %454, %453 : vector<1x352xf32>
      %456 = arith.addf %452, %455 : vector<1x352xf32>
      %457 = vector.extract_strided_slice %25 {offsets = [0, 178], sizes = [1, 352], strides = [1, 1]} : vector<1x640xf32> to vector<1x352xf32>
      %458 = vector.broadcast %68 : f32 to vector<1x352xf32>
      %459 = arith.mulf %458, %457 : vector<1x352xf32>
      %460 = arith.addf %432, %459 : vector<1x352xf32>
      %461 = vector.extract_strided_slice %26 {offsets = [0, 178], sizes = [1, 352], strides = [1, 1]} : vector<1x640xf32> to vector<1x352xf32>
      %462 = vector.broadcast %117 : f32 to vector<1x352xf32>
      %463 = arith.mulf %462, %461 : vector<1x352xf32>
      %464 = arith.addf %460, %463 : vector<1x352xf32>
      %465 = vector.extract_strided_slice %25 {offsets = [0, 194], sizes = [1, 352], strides = [1, 1]} : vector<1x640xf32> to vector<1x352xf32>
      %466 = vector.broadcast %69 : f32 to vector<1x352xf32>
      %467 = arith.mulf %466, %465 : vector<1x352xf32>
      %468 = arith.addf %440, %467 : vector<1x352xf32>
      %469 = vector.extract_strided_slice %26 {offsets = [0, 194], sizes = [1, 352], strides = [1, 1]} : vector<1x640xf32> to vector<1x352xf32>
      %470 = vector.broadcast %118 : f32 to vector<1x352xf32>
      %471 = arith.mulf %470, %469 : vector<1x352xf32>
      %472 = arith.addf %468, %471 : vector<1x352xf32>
      %473 = vector.extract_strided_slice %25 {offsets = [0, 195], sizes = [1, 352], strides = [1, 1]} : vector<1x640xf32> to vector<1x352xf32>
      %474 = vector.broadcast %70 : f32 to vector<1x352xf32>
      %475 = arith.mulf %474, %473 : vector<1x352xf32>
      %476 = arith.addf %448, %475 : vector<1x352xf32>
      %477 = vector.extract_strided_slice %26 {offsets = [0, 195], sizes = [1, 352], strides = [1, 1]} : vector<1x640xf32> to vector<1x352xf32>
      %478 = vector.broadcast %119 : f32 to vector<1x352xf32>
      %479 = arith.mulf %478, %477 : vector<1x352xf32>
      %480 = arith.addf %476, %479 : vector<1x352xf32>
      %481 = vector.extract_strided_slice %25 {offsets = [0, 196], sizes = [1, 352], strides = [1, 1]} : vector<1x640xf32> to vector<1x352xf32>
      %482 = vector.broadcast %71 : f32 to vector<1x352xf32>
      %483 = arith.mulf %482, %481 : vector<1x352xf32>
      %484 = arith.addf %456, %483 : vector<1x352xf32>
      %485 = vector.extract_strided_slice %26 {offsets = [0, 196], sizes = [1, 352], strides = [1, 1]} : vector<1x640xf32> to vector<1x352xf32>
      %486 = vector.broadcast %120 : f32 to vector<1x352xf32>
      %487 = arith.mulf %486, %485 : vector<1x352xf32>
      %488 = arith.addf %484, %487 : vector<1x352xf32>
      %489 = vector.extract_strided_slice %25 {offsets = [0, 197], sizes = [1, 352], strides = [1, 1]} : vector<1x640xf32> to vector<1x352xf32>
      %490 = vector.broadcast %72 : f32 to vector<1x352xf32>
      %491 = arith.mulf %490, %489 : vector<1x352xf32>
      %492 = arith.addf %464, %491 : vector<1x352xf32>
      %493 = vector.extract_strided_slice %26 {offsets = [0, 197], sizes = [1, 352], strides = [1, 1]} : vector<1x640xf32> to vector<1x352xf32>
      %494 = vector.broadcast %121 : f32 to vector<1x352xf32>
      %495 = arith.mulf %494, %493 : vector<1x352xf32>
      %496 = arith.addf %492, %495 : vector<1x352xf32>
      %497 = vector.extract_strided_slice %25 {offsets = [0, 198], sizes = [1, 352], strides = [1, 1]} : vector<1x640xf32> to vector<1x352xf32>
      %498 = vector.broadcast %73 : f32 to vector<1x352xf32>
      %499 = arith.mulf %498, %497 : vector<1x352xf32>
      %500 = arith.addf %472, %499 : vector<1x352xf32>
      %501 = vector.extract_strided_slice %26 {offsets = [0, 198], sizes = [1, 352], strides = [1, 1]} : vector<1x640xf32> to vector<1x352xf32>
      %502 = vector.broadcast %122 : f32 to vector<1x352xf32>
      %503 = arith.mulf %502, %501 : vector<1x352xf32>
      %504 = arith.addf %500, %503 : vector<1x352xf32>
      %505 = vector.extract_strided_slice %25 {offsets = [0, 199], sizes = [1, 352], strides = [1, 1]} : vector<1x640xf32> to vector<1x352xf32>
      %506 = vector.broadcast %74 : f32 to vector<1x352xf32>
      %507 = arith.mulf %506, %505 : vector<1x352xf32>
      %508 = arith.addf %480, %507 : vector<1x352xf32>
      %509 = vector.extract_strided_slice %26 {offsets = [0, 199], sizes = [1, 352], strides = [1, 1]} : vector<1x640xf32> to vector<1x352xf32>
      %510 = vector.broadcast %123 : f32 to vector<1x352xf32>
      %511 = arith.mulf %510, %509 : vector<1x352xf32>
      %512 = arith.addf %508, %511 : vector<1x352xf32>
      %513 = vector.extract_strided_slice %25 {offsets = [0, 200], sizes = [1, 352], strides = [1, 1]} : vector<1x640xf32> to vector<1x352xf32>
      %514 = vector.broadcast %75 : f32 to vector<1x352xf32>
      %515 = arith.mulf %514, %513 : vector<1x352xf32>
      %516 = arith.addf %488, %515 : vector<1x352xf32>
      %517 = vector.extract_strided_slice %26 {offsets = [0, 200], sizes = [1, 352], strides = [1, 1]} : vector<1x640xf32> to vector<1x352xf32>
      %518 = vector.broadcast %124 : f32 to vector<1x352xf32>
      %519 = arith.mulf %518, %517 : vector<1x352xf32>
      %520 = arith.addf %516, %519 : vector<1x352xf32>
      %521 = arith.addf %520, %496 : vector<1x352xf32>
      %522 = arith.addf %504, %512 : vector<1x352xf32>
      %523 = arith.addf %521, %522 : vector<1x352xf32>
      %524 = arith.negf %523 : vector<1x352xf32>
      %525 = math.exp %524 : vector<1x352xf32>
      %cst_25 = arith.constant 1.000000e+00 : f32
      %526 = vector.broadcast %cst_25 : f32 to vector<1x352xf32>
      %527 = arith.addf %526, %525 : vector<1x352xf32>
      %528 = arith.divf %526, %527 : vector<1x352xf32>
      %c0_26 = arith.constant 0 : index
      %c0_27 = arith.constant 0 : index
      %c0_28 = arith.constant 0 : index
      %529 = vector.load %arg4[%c0_26, %c0_27, %c0_28] : memref<1x1x352xf32, #tpu.memory_space<vmem>>, vector<1x1x352xf32>
      %530 = vector.shape_cast %529 : vector<1x1x352xf32> to vector<1x352xf32>
      %531 = vector.shape_cast %528 : vector<1x352xf32> to vector<1x1x352xf32>
      tpu.vector_store %arg4[%c0_26, %c0_27, %c0_28], %531 {strides = array<i32>} : memref<1x1x352xf32, #tpu.memory_space<vmem>>, vector<1x1x352xf32>,
    } else {
    }
    return
  }
  func.func @transform_0(%arg0: i32, %arg1: i32) -> i32 {
    %c0_i32 = arith.constant 0 : i32
    %c0_i32_0 = arith.constant 0 : i32
    return %c0_i32 : i32
  }
  func.func @transform_1(%arg0: i32, %arg1: i32) -> (i32, i32, i32) {
    %c0_i32 = arith.constant 0 : i32
    %c0_i32_0 = arith.constant 0 : i32
    return %arg0, %arg1, %c0_i32 : i32, i32, i32
  }
  func.func @transform_2(%arg0: i32, %arg1: i32) -> (i32, i32, i32) {
    %c0_i32 = arith.constant 0 : i32
    %c0_i32_0 = arith.constant 0 : i32
    %c0_i32_1 = arith.constant 0 : i32
    return %arg0, %c0_i32, %c0_i32_0 : i32, i32, i32
  }
}

</mosaic_0001>

<llo_original>
// kernel: spatial_attention.1
$region0: #{spatial_attention.1}
  #allocation0 [shape = 'u32[]', space=smem, size = 0x4, offset = 0x4, fixed_abs, tag = 'smem constant byte address 0x4 - core index']
  #allocation1 [shape = 'u32[144,128]{1,0:T(1,128)}', space=vmem, size = 0x12000, scoped, tag = 'internal scratch']
  #allocation2 [shape = 'f32[2,640]{1,0:T(2,128)}', space=vmem, size = 0x1400, scoped, tag = 'scratch operand']
  %s0 = inlined_call_operand.vmem [shape: f32[98], index: 0, kind: input, shape index: {}]
  %s1 = inlined_call_operand.vmem [shape: f32[2,4,352], index: 1, kind: input, shape index: {}]
  %s2 = inlined_call_operand.vmem [shape: f32[2,1,352], index: 2, kind: output, shape index: {}]
  %s3 = sld [smem:[#allocation0]]
  $region57: #{spatial_attention.1} parent=0
    _
  %s5 = ssub.s32 1, %s3
  %s6 = scalar_select 0, %s5, %s3
  $region1: #{spatial_attention.1} parent=0
    #allocation3 [shape = 'u8[512]{0}', space=smem, size = 0x200, scoped, tag = 'input window, operand 0, single buffered']
    #allocation4 [shape = 's32[2]{0}', space=sflag, size = 0x8, scoped, tag = 'scoped memory for spatial_attention.1']
    %7 = vsyncpa [#allocation4], 0
    loop: start=0, step=1, limit=4
    $region2: #{spatial_attention.1} parent=1 // loop_pre_header
      _
    $region3: #{spatial_attention.1} parent=1 // loop_header
      %s9 = sphi 0, %s13
      %p10 = scmp.ge.s32.totalorder %s9, 4
      %s16 = sphi 0, %s28
      %s17 = sphi 0, %s24
      %s18 = sphi 0, %s16
      %s19 = sphi 0, %s17
      %s20 = sphi 0, %s18
      %s21 = sphi 0, %s19
      %s29 = sphi 0, %s29
      %s31 = sphi 0, %s29
      %s32 = sphi 0, %s31
      %s46 = sphi 0, %s32
      %s54 = sphi 0, %s56
      %s57 = sphi 0, %s54
      %s58 = sphi 0, %s57
      %s74 = sphi 0, %s58
      %s80 = sphi 0, %s82
      %s83 = sphi 0, %s80
      %s84 = sphi 0, %s83
      %s100 = sphi 0, %s84
    $region4: #{spatial_attention.1} parent=1 // loop_header_branch
      %12 = sbr.rel (%p10) target = $region8
    $region5: #{spatial_attention.1} parent=1 // loop_body
      %s14 = ssub.s32 %s9, 1
      %s15 = ssub.s32 %s9, 2
      %s22 = sadd.s32 1, %s17
      %p23 = scmp.ge.s32.totalorder %s22, 1
      %s24 = scalar_select %p23, 0, %s22
      %s25 = sadd.s32 1, %s16
      %s26 = scalar_select %p23, %s25, %s16
      %p27 = scmp.ge.s32.totalorder %s26, 2
      %s28 = scalar_select %p27, 0, %s26
      %s30 = sadd.s32 %s29, 1
      %p33 = scmp.eq.s32.totalorder %s9, 1
      %p34 = scmp.ne.s32.totalorder %s29, %s31
      %p35 = scmp.eq.s32.totalorder %s9, 0
      %p36 = por %p34, %p35
      %p37 = scmp.ne.s32.totalorder %s29, %s31
      %p38 = scmp.eq.s32.totalorder %s14, 1
      %p39 = por %p37, %p38
      %p40 = scmp.ne.s32.totalorder %s31, %s32
      %p41 = scmp.eq.s32.totalorder %s14, 0
      %p42 = por %p40, %p41
      %p43 = scmp.ne.s32.totalorder %s31, %s32
      %p44 = scmp.eq.s32.totalorder %s15, 1
      %p45 = por %p43, %p44
      %p47 = scmp.ne.s32.totalorder %s32, %s46
      %p48 = scmp.eq.s32.totalorder %s15, 0
      %p49 = por %p47, %p48
      %s50 = ssub.s32 %s16, %s28
      %s51 = ssub.s32 %s17, %s24
      %s52 = sor.u32 %s50, %s51
      %p53 = scmp.eq.s32.totalorder %s52, 0
      %s55 = sadd.s32 %s54, 1
      %s56 = scalar_select %p53, %s54, %s55
      %p59 = pneg %p53
      %p60 = scmp.eq.s32.totalorder %s9, 1
      %p61 = por %p59, %p60
      %p62 = scmp.ne.s32.totalorder %s54, %s57
      %p63 = scmp.eq.s32.totalorder %s9, 0
      %p64 = por %p62, %p63
      %p65 = scmp.ne.s32.totalorder %s54, %s57
      %p66 = scmp.eq.s32.totalorder %s14, 1
      %p67 = por %p65, %p66
      %p68 = scmp.ne.s32.totalorder %s57, %s58
      %p69 = scmp.eq.s32.totalorder %s14, 0
      %p70 = por %p68, %p69
      %p71 = scmp.ne.s32.totalorder %s57, %s58
      %p72 = scmp.eq.s32.totalorder %s15, 1
      %p73 = por %p71, %p72
      %p75 = scmp.ne.s32.totalorder %s58, %s74
      %p76 = scmp.eq.s32.totalorder %s15, 0
      %p77 = por %p75, %p76
      %s78 = ssub.s32 %s16, %s28
      %p79 = scmp.eq.s32.totalorder %s78, 0
      %s81 = sadd.s32 %s80, 1
      %s82 = scalar_select %p79, %s80, %s81
      %p85 = pneg %p79
      %p86 = scmp.eq.s32.totalorder %s9, 1
      %p87 = por %p85, %p86
      %p88 = scmp.ne.s32.totalorder %s80, %s83
      %p89 = scmp.eq.s32.totalorder %s9, 0
      %p90 = por %p88, %p89
      %p91 = scmp.ne.s32.totalorder %s80, %s83
      %p92 = scmp.eq.s32.totalorder %s14, 1
      %p93 = por %p91, %p92
      %p94 = scmp.ne.s32.totalorder %s83, %s84
      %p95 = scmp.eq.s32.totalorder %s14, 0
      %p96 = por %p94, %p95
      %p97 = scmp.ne.s32.totalorder %s83, %s84
      %p98 = scmp.eq.s32.totalorder %s15, 1
      %p99 = por %p97, %p98
      %p101 = scmp.ne.s32.totalorder %s84, %s100
      %p102 = scmp.eq.s32.totalorder %s15, 0
      %p103 = por %p101, %p102
      %p104 = scmp.le.s32.totalorder 1, %s9
      %p105 = scmp.lt.s32.totalorder %s9, 3
      %p106 = pnand %p104, %p105
      %p107 = pneg %p106
      // Predicated region
      $region9: #{spatial_attention.1} parent=5 // pred_check
        _
      $region10: #{spatial_attention.1} parent=5 // pred_check_branch
        %109 = sbr.rel (%p106) target = $region12
      $region11: #{spatial_attention.1} parent=5 // pred_region
        %s110 = ssub.s32 %s9, 1
        // Predicated region
        $region13: #{spatial_attention.1} parent=11 // pred_check
          %p111 = pneg %p42
        $region14: #{spatial_attention.1} parent=11 // pred_check_branch
          %113 = sbr.rel (%p111) target = $region16
        $region15: #{spatial_attention.1} parent=11 // pred_region
          %s115 = ssub.s32 16, 16
          %116 = vsyncadd [#allocation4], %s115
          %s118 = sshll.u32 %s0, 4
          %s119 = int_to_ptr.vmem [resolvable:$true] %s118
          %121 = dma.vmem_to_smem %s119, 16, [#allocation3], [#allocation4]
        $region16: #{spatial_attention.1} parent=11 // pred_fallthru
          _
      $region12: #{spatial_attention.1} parent=5 // pred_fallthru
        _
      %p122 = scmp.lt.s32.totalorder %s9, 2
      // Predicated region
      $region17: #{spatial_attention.1} parent=5 // pred_check
        %p123 = pneg %p122
      $region18: #{spatial_attention.1} parent=5 // pred_check_branch
        %125 = sbr.rel (%p123) target = $region20
      $region19: #{spatial_attention.1} parent=5 // pred_region
        // Predicated region
        $region21: #{spatial_attention.1} parent=19 // pred_check
          %p126 = pneg %p64
        $region22: #{spatial_attention.1} parent=19 // pred_check_branch
          %128 = sbr.rel (%p126) target = $region24
        $region23: #{spatial_attention.1} parent=19 // pred_region
          %p129 = scmp.lt.s32.totalorder %s16, 1
          %s130 = scalar_select %p129, %s16, 1
          %p131 = scmp.lt.s32.totalorder %s17, 0
          %s132 = scalar_select %p131, %s17, 0
          %s133 = smul.addr %s132, 3
          %s134 = smul.addr %s130, 3
          %s135 = sadd.s32 %s133, %s134
          %s136 = smul.addr %s135, 4
          %s137 = scalar_lea.vmem %s1, %s136
        $region24: #{spatial_attention.1} parent=19 // pred_fallthru
          _
      $region20: #{spatial_attention.1} parent=5 // pred_fallthru
        _
      %p138 = scmp.le.s32.totalorder 1, %s9
      %p139 = scmp.lt.s32.totalorder %s9, 3
      %p140 = pnand %p138, %p139
      %p141 = pneg %p140
      // Predicated region
      $region25: #{spatial_attention.1} parent=5 // pred_check
        _
      $region26: #{spatial_attention.1} parent=5 // pred_check_branch
        %143 = sbr.rel (%p140) target = $region28
      $region27: #{spatial_attention.1} parent=5 // pred_region
        %s144 = ssub.s32 %s9, 1
        // Predicated region
        $region29: #{spatial_attention.1} parent=27 // pred_check
          %p145 = pneg %p42
        $region30: #{spatial_attention.1} parent=27 // pred_check_branch
          %147 = sbr.rel (%p145) target = $region32
        $region31: #{spatial_attention.1} parent=27 // pred_region
          %148 = dma.done [#allocation4], 16
        $region32: #{spatial_attention.1} parent=27 // pred_fallthru
          _
        %149 = sfence
        %p150 = pneg %p42
        %p151 = pneg %p39
        %p152 = scmp.lt.s32.totalorder %s18, 1
        %s153 = scalar_select %p152, %s18, 1
        %p154 = scmp.lt.s32.totalorder %s19, 0
        %s155 = scalar_select %p154, %s19, 0
        %s156 = smul.addr %s155, 3
        %s157 = smul.addr %s153, 3
        %s158 = sadd.s32 %s156, %s157
        %s159 = smul.addr %s158, 4
        %s160 = scalar_lea.vmem %s1, %s159
        %p161 = pneg %p70
        %p162 = pneg %p67
        %p163 = pneg %p96
        %p164 = pneg %p93
        %p165 = scmp.lt.s32.totalorder %s18, 1
        %s166 = scalar_select %p165, %s18, 1
        %s167 = smul.addr %s166, 3
        %s168 = scalar_lea.vmem %s2, %s167
        %p169 = scmp.lt.s32.totalorder %s18, 1
        %s170 = scalar_select %p169, %s18, 1
        %p171 = scmp.lt.s32.totalorder %s19, 0
        %s172 = scalar_select %p171, %s19, 0
        %s173 = smul.addr %s172, 3
        %s174 = smul.addr %s170, 3
        %s175 = sadd.s32 %s173, %s174
        %s176 = smul.addr %s175, 4
        %s177 = scalar_lea.vmem %s1, %s176
        %p178 = scmp.lt.s32.totalorder %s18, 1
        %s179 = scalar_select %p178, %s18, 1
        %s180 = smul.addr %s179, 3
        %s181 = scalar_lea.vmem %s2, %s180
        %v182 = vld [vmem:[%s177] ss:$4 sm:$0x7]
        %s183 = scalar_lea.vmem %s177, 1
        %v184 = vld [vmem:[%s183] ss:$4 sm:$0x7]
        %v185 = vadd.f32 %v182, %v184
        %v186 = vmax.f32 %v182, %v184
        %s187 = scalar_lea.vmem %s177, 2
        %v188 = vld [vmem:[%s187] ss:$4 sm:$0x7]
        %v189 = vadd.f32 %v185, %v188
        %v190 = vmax.f32 %v186, %v188
        %s191 = scalar_lea.vmem %s177, 3
        %v192 = vld [vmem:[%s191] ss:$4 sm:$0x7]
        %v193 = vadd.f32 %v189, %v192
        %v194 = vmax.f32 %v190, %v192
        %p195 = scmp.eq.s32.totalorder %s19, 0
        // Predicated region
        $region33: #{spatial_attention.1} parent=27 // pred_check
          %p196 = pneg %p195
        $region34: #{spatial_attention.1} parent=27 // pred_check_branch
          %198 = sbr.rel (%p196) target = $region36
        $region35: #{spatial_attention.1} parent=27 // pred_region
          %199 = vst [vmem:[#allocation2] sm:$0xff] 0.0
          %200 = vst [vmem:[#allocation2 + $0x8] sm:$0x3] 0.0
          %v201 = vlaneseq
          %vm202 = vcmp.ge.s32.totalorder %v201, 0
          %vm203 = vcmp.lt.s32.totalorder %v201, 352
          %vm204 = vmand %vm202, %vm203
          %s205 = scalar_lea.vmem [#allocation2], 2
          %206 = vst.msk [vmem:[%s205] ss:$2 sm:$0x7] %vm204, %v193
          %s207 = scalar_lea.vmem [#allocation2], 3
          %208 = vst.msk [vmem:[%s207] ss:$2 sm:$0x7] %vm204, %v194
        $region36: #{spatial_attention.1} parent=27 // pred_fallthru
          _
        %p209 = scmp.gt.s32.totalorder %s19, 0
        // Predicated region
        $region37: #{spatial_attention.1} parent=27 // pred_check
          %p210 = pneg %p209
        $region38: #{spatial_attention.1} parent=27 // pred_check_branch
          %212 = sbr.rel (%p210) target = $region40
        $region39: #{spatial_attention.1} parent=27 // pred_region
          %s213 = scalar_lea.vmem [#allocation2], 2
          %v214 = vld [vmem:[%s213] ss:$2 sm:$0x7]
          %v215 = vadd.f32 %v214, %v193
          %v216 = vlaneseq
          %vm217 = vcmp.ge.s32.totalorder %v216, 0
          %vm218 = vcmp.lt.s32.totalorder %v216, 352
          %vm219 = vmand %vm217, %vm218
          %220 = vst.msk [vmem:[%s213] ss:$2 sm:$0x7] %vm219, %v215
          %s221 = scalar_lea.vmem [#allocation2], 3
          %v222 = vld [vmem:[%s221] ss:$2 sm:$0x7]
          %v223 = vmax.f32 %v222, %v194
          %224 = vst.msk [vmem:[%s221] ss:$2 sm:$0x7] %vm219, %v223
        $region40: #{spatial_attention.1} parent=27 // pred_fallthru
          _
        // Predicated region
        $region41: #{spatial_attention.1} parent=27 // pred_check
          %p225 = pneg %p195
        $region42: #{spatial_attention.1} parent=27 // pred_check_branch
          %227 = sbr.rel (%p225) target = $region44
        $region43: #{spatial_attention.1} parent=27 // pred_region
          %v228 = vld [vmem:[#allocation2] ss:$2 sm:$0x1f]
          %v229 = vmul.f32 %v228, 0.25
          %s230 = scalar_lea.vmem [#allocation2], 1
          %v231 = vld [vmem:[%s230] ss:$2 sm:$0x1f]
          %s232 = sld [smem:[#allocation3]]
          %s233 = sld [smem:[#allocation3 + $0x1]]
          %s234 = sld [smem:[#allocation3 + $0x2]]
          %s235 = sld [smem:[#allocation3 + $0x3]]
          %s236 = sld [smem:[#allocation3 + $0x4]]
          %s237 = sld [smem:[#allocation3 + $0x5]]
          %s238 = sld [smem:[#allocation3 + $0x6]]
          %s239 = sld [smem:[#allocation3 + $0x7]]
          %s240 = sld [smem:[#allocation3 + $0x8]]
          %s241 = sld [smem:[#allocation3 + $0x9]]
          %s242 = sld [smem:[#allocation3 + $0xa]]
          %s243 = sld [smem:[#allocation3 + $0xb]]
          %s244 = sld [smem:[#allocation3 + $0xc]]
          %s245 = sld [smem:[#allocation3 + $0xd]]
          %s246 = sld [smem:[#allocation3 + $0xe]]
          %s247 = sld [smem:[#allocation3 + $0xf]]
          %s248 = sld [smem:[#allocation3 + $0x10]]
          %s249 = sld [smem:[#allocation3 + $0x11]]
          %s250 = sld [smem:[#allocation3 + $0x12]]
          %s251 = sld [smem:[#allocation3 + $0x13]]
          %s252 = sld [smem:[#allocation3 + $0x14]]
          %s253 = sld [smem:[#allocation3 + $0x15]]
          %s254 = sld [smem:[#allocation3 + $0x16]]
          %s255 = sld [smem:[#allocation3 + $0x17]]
          %s256 = sld [smem:[#allocation3 + $0x18]]
          %s257 = sld [smem:[#allocation3 + $0x19]]
          %s258 = sld [smem:[#allocation3 + $0x1a]]
          %s259 = sld [smem:[#allocation3 + $0x1b]]
          %s260 = sld [smem:[#allocation3 + $0x1c]]
          %s261 = sld [smem:[#allocation3 + $0x1d]]
          %s262 = sld [smem:[#allocation3 + $0x1e]]
          %s263 = sld [smem:[#allocation3 + $0x1f]]
          %s264 = sld [smem:[#allocation3 + $0x20]]
          %s265 = sld [smem:[#allocation3 + $0x21]]
          %s266 = sld [smem:[#allocation3 + $0x22]]
          %s267 = sld [smem:[#allocation3 + $0x23]]
          %s268 = sld [smem:[#allocation3 + $0x24]]
          %s269 = sld [smem:[#allocation3 + $0x25]]
          %s270 = sld [smem:[#allocation3 + $0x26]]
          %s271 = sld [smem:[#allocation3 + $0x27]]
          %s272 = sld [smem:[#allocation3 + $0x28]]
          %s273 = sld [smem:[#allocation3 + $0x29]]
          %s274 = sld [smem:[#allocation3 + $0x2a]]
          %s275 = sld [smem:[#allocation3 + $0x2b]]
          %s276 = sld [smem:[#allocation3 + $0x2c]]
          %s277 = sld [smem:[#allocation3 + $0x2d]]
          %s278 = sld [smem:[#allocation3 + $0x2e]]
          %s279 = sld [smem:[#allocation3 + $0x2f]]
          %s280 = sld [smem:[#allocation3 + $0x30]]
          %s281 = sld [smem:[#allocation3 + $0x31]]
          %s282 = sld [smem:[#allocation3 + $0x32]]
          %s283 = sld [smem:[#allocation3 + $0x33]]
          %s284 = sld [smem:[#allocation3 + $0x34]]
          %s285 = sld [smem:[#allocation3 + $0x35]]
          %s286 = sld [smem:[#allocation3 + $0x36]]
          %s287 = sld [smem:[#allocation3 + $0x37]]
          %s288 = sld [smem:[#allocation3 + $0x38]]
          %s289 = sld [smem:[#allocation3 + $0x39]]
          %s290 = sld [smem:[#allocation3 + $0x3a]]
          %s291 = sld [smem:[#allocation3 + $0x3b]]
          %s292 = sld [smem:[#allocation3 + $0x3c]]
          %s293 = sld [smem:[#allocation3 + $0x3d]]
          %s294 = sld [smem:[#allocation3 + $0x3e]]
          %s295 = sld [smem:[#allocation3 + $0x3f]]
          %s296 = sld [smem:[#allocation3 + $0x40]]
          %s297 = sld [smem:[#allocation3 + $0x41]]
          %s298 = sld [smem:[#allocation3 + $0x42]]
          %s299 = sld [smem:[#allocation3 + $0x43]]
          %s300 = sld [smem:[#allocation3 + $0x44]]
          %s301 = sld [smem:[#allocation3 + $0x45]]
          %s302 = sld [smem:[#allocation3 + $0x46]]
          %s303 = sld [smem:[#allocation3 + $0x47]]
          %s304 = sld [smem:[#allocation3 + $0x48]]
          %s305 = sld [smem:[#allocation3 + $0x49]]
          %s306 = sld [smem:[#allocation3 + $0x4a]]
          %s307 = sld [smem:[#allocation3 + $0x4b]]
          %s308 = sld [smem:[#allocation3 + $0x4c]]
          %s309 = sld [smem:[#allocation3 + $0x4d]]
          %s310 = sld [smem:[#allocation3 + $0x4e]]
          %s311 = sld [smem:[#allocation3 + $0x4f]]
          %s312 = sld [smem:[#allocation3 + $0x50]]
          %s313 = sld [smem:[#allocation3 + $0x51]]
          %s314 = sld [smem:[#allocation3 + $0x52]]
          %s315 = sld [smem:[#allocation3 + $0x53]]
          %s316 = sld [smem:[#allocation3 + $0x54]]
          %s317 = sld [smem:[#allocation3 + $0x55]]
          %s318 = sld [smem:[#allocation3 + $0x56]]
          %s319 = sld [smem:[#allocation3 + $0x57]]
          %s320 = sld [smem:[#allocation3 + $0x58]]
          %s321 = sld [smem:[#allocation3 + $0x59]]
          %s322 = sld [smem:[#allocation3 + $0x5a]]
          %s323 = sld [smem:[#allocation3 + $0x5b]]
          %s324 = sld [smem:[#allocation3 + $0x5c]]
          %s325 = sld [smem:[#allocation3 + $0x5d]]
          %s326 = sld [smem:[#allocation3 + $0x5e]]
          %s327 = sld [smem:[#allocation3 + $0x5f]]
          %s328 = sld [smem:[#allocation3 + $0x60]]
          %s329 = sld [smem:[#allocation3 + $0x61]]
          %v330 = vstv %s232
          %v331 = vmul.f32 %v330, %v229
          %v332 = vadd.f32 %v331, 0.0
          %v333 = vstv %s281
          %v334 = vmul.f32 %v333, %v231
          %v335 = vadd.f32 %v332, %v334
          %v336 = vstv %s233
          %v337 = vmul.f32 %v336, %v229
          %v338 = vadd.f32 %v337, 0.0
          %v339 = vstv %s282
          %v340 = vmul.f32 %v339, %v231
          %v341 = vadd.f32 %v338, %v340
          %v342 = vstv %s234
          %v343 = vmul.f32 %v342, %v229
          %v344 = vadd.f32 %v343, 0.0
          %v345 = vstv %s283
          %v346 = vmul.f32 %v345, %v231
          %v347 = vadd.f32 %v344, %v346
          %v348 = vstv %s235
          %v349 = vmul.f32 %v348, %v229
          %v350 = vadd.f32 %v349, 0.0
          %v351 = vstv %s284
          %v352 = vmul.f32 %v351, %v231
          %v353 = vadd.f32 %v350, %v352
          %v354 = vstv %s236
          %v355 = vmul.f32 %v354, %v229
          %357 = vrot.lane.b32.xlu0 %v355, 124
          %v358 = vpop.permute.xlu0 %357
          %v359 = vrot.slane %v358, 1
          %vm360 = vcmask 1014784
          %v361 = vsel %vm360, %v358, %v359
          %v363 = vadd.f32 %v335, %v361
          %v364 = vstv %s285
          %v365 = vmul.f32 %v364, %v231
          %367 = vrot.lane.b32.xlu0 %v365, 124
          %v368 = vpop.permute.xlu0 %367
          %v369 = vrot.slane %v368, 1
          %v370 = vsel %vm360, %v368, %v369
          %v372 = vadd.f32 %v363, %v370
          %v373 = vstv %s237
          %v374 = vmul.f32 %v373, %v229
          %376 = vrot.lane.b32.xlu0 %v374, 124
          %v377 = vpop.permute.xlu0 %376
          %v378 = vrot.slane %v377, 1
          %v379 = vsel %vm360, %v377, %v378
          %v381 = vadd.f32 %v341, %v379
          %v382 = vstv %s286
          %v383 = vmul.f32 %v382, %v231
          %385 = vrot.lane.b32.xlu0 %v383, 124
          %v386 = vpop.permute.xlu0 %385
          %v387 = vrot.slane %v386, 1
          %v388 = vsel %vm360, %v386, %v387
          %v390 = vadd.f32 %v381, %v388
          %v391 = vstv %s238
          %v392 = vmul.f32 %v391, %v229
          %394 = vrot.lane.b32.xlu0 %v392, 124
          %v395 = vpop.permute.xlu0 %394
          %v396 = vrot.slane %v395, 1
          %v397 = vsel %vm360, %v395, %v396
          %v399 = vadd.f32 %v347, %v397
          %v400 = vstv %s287
          %v401 = vmul.f32 %v400, %v231
          %403 = vrot.lane.b32.xlu0 %v401, 124
          %v404 = vpop.permute.xlu0 %403
          %v405 = vrot.slane %v404, 1
          %v406 = vsel %vm360, %v404, %v405
          %v408 = vadd.f32 %v399, %v406
          %v409 = vstv %s239
          %v410 = vmul.f32 %v409, %v229
          %412 = vrot.lane.b32.xlu0 %v410, 109
          %v413 = vpop.permute.xlu0 %412
          %v414 = vrot.slane %v413, 1
          %vm415 = vcmask 891904
          %v416 = vsel %vm415, %v413, %v414
          %v418 = vadd.f32 %v353, %v416
          %v419 = vstv %s288
          %v420 = vmul.f32 %v419, %v231
          %422 = vrot.lane.b32.xlu0 %v420, 109
          %v423 = vpop.permute.xlu0 %422
          %v424 = vrot.slane %v423, 1
          %v425 = vsel %vm415, %v423, %v424
          %v427 = vadd.f32 %v418, %v425
          %v428 = vstv %s240
          %v429 = vmul.f32 %v428, %v229
          %431 = vrot.lane.b32.xlu0 %v429, 105
          %v432 = vpop.permute.xlu0 %431
          %v433 = vrot.slane %v432, 1
          %vm434 = vcmask 859136
          %v435 = vsel %vm434, %v432, %v433
          %v437 = vadd.f32 %v372, %v435
          %v438 = vstv %s289
          %v439 = vmul.f32 %v438, %v231
          %441 = vrot.lane.b32.xlu0 %v439, 105
          %v442 = vpop.permute.xlu0 %441
          %v443 = vrot.slane %v442, 1
          %v444 = vsel %vm434, %v442, %v443
          %v446 = vadd.f32 %v437, %v444
          %v447 = vstv %s241
          %v448 = vmul.f32 %v447, %v229
          %450 = vrot.lane.b32.xlu0 %v448, 105
          %v451 = vpop.permute.xlu0 %450
          %v452 = vrot.slane %v451, 1
          %v453 = vsel %vm434, %v451, %v452
          %v455 = vadd.f32 %v390, %v453
          %v456 = vstv %s290
          %v457 = vmul.f32 %v456, %v231
          %459 = vrot.lane.b32.xlu0 %v457, 105
          %v460 = vpop.permute.xlu0 %459
          %v461 = vrot.slane %v460, 1
          %v462 = vsel %vm434, %v460, %v461
          %v464 = vadd.f32 %v455, %v462
          %v465 = vstv %s242
          %v466 = vmul.f32 %v465, %v229
          %468 = vrot.lane.b32.xlu0 %v466, 105
          %v469 = vpop.permute.xlu0 %468
          %v470 = vrot.slane %v469, 1
          %v471 = vsel %vm434, %v469, %v470
          %v473 = vadd.f32 %v408, %v471
          %v474 = vstv %s291
          %v475 = vmul.f32 %v474, %v231
          %477 = vrot.lane.b32.xlu0 %v475, 105
          %v478 = vpop.permute.xlu0 %477
          %v479 = vrot.slane %v478, 1
          %v480 = vsel %vm434, %v478, %v479
          %v482 = vadd.f32 %v473, %v480
          %v483 = vstv %s243
          %v484 = vmul.f32 %v483, %v229
          %486 = vrot.lane.b32.xlu0 %v484, 105
          %v487 = vpop.permute.xlu0 %486
          %v488 = vrot.slane %v487, 1
          %v489 = vsel %vm434, %v487, %v488
          %v491 = vadd.f32 %v427, %v489
          %v492 = vstv %s292
          %v493 = vmul.f32 %v492, %v231
          %495 = vrot.lane.b32.xlu0 %v493, 105
          %v496 = vpop.permute.xlu0 %495
          %v497 = vrot.slane %v496, 1
          %v498 = vsel %vm434, %v496, %v497
          %v500 = vadd.f32 %v491, %v498
          %v501 = vstv %s244
          %v502 = vmul.f32 %v501, %v229
          %504 = vrot.lane.b32.xlu0 %v502, 101
          %v505 = vpop.permute.xlu0 %504
          %v506 = vrot.slane %v505, 1
          %vm507 = vcmask 826368
          %v508 = vsel %vm507, %v505, %v506
          %v510 = vadd.f32 %v446, %v508
          %v511 = vstv %s293
          %v512 = vmul.f32 %v511, %v231
          %514 = vrot.lane.b32.xlu0 %v512, 101
          %v515 = vpop.permute.xlu0 %514
          %v516 = vrot.slane %v515, 1
          %v517 = vsel %vm507, %v515, %v516
          %v519 = vadd.f32 %v510, %v517
          %v520 = vstv %s245
          %v521 = vmul.f32 %v520, %v229
          %523 = vrot.lane.b32.xlu0 %v521, 101
          %v524 = vpop.permute.xlu0 %523
          %v525 = vrot.slane %v524, 1
          %v526 = vsel %vm507, %v524, %v525
          %v528 = vadd.f32 %v464, %v526
          %v529 = vstv %s294
          %v530 = vmul.f32 %v529, %v231
          %532 = vrot.lane.b32.xlu0 %v530, 101
          %v533 = vpop.permute.xlu0 %532
          %v534 = vrot.slane %v533, 1
          %v535 = vsel %vm507, %v533, %v534
          %v537 = vadd.f32 %v528, %v535
          %v538 = vstv %s246
          %v539 = vmul.f32 %v538, %v229
          %541 = vrot.lane.b32.xlu0 %v539, 86
          %v542 = vpop.permute.xlu0 %541
          %v543 = vrot.slane %v542, 1
          %vm544 = vcmask 703488
          %v545 = vsel %vm544, %v542, %v543
          %v547 = vadd.f32 %v482, %v545
          %v548 = vstv %s295
          %v549 = vmul.f32 %v548, %v231
          %551 = vrot.lane.b32.xlu0 %v549, 86
          %v552 = vpop.permute.xlu0 %551
          %v553 = vrot.slane %v552, 1
          %v554 = vsel %vm544, %v552, %v553
          %v556 = vadd.f32 %v547, %v554
          %v557 = vstv %s247
          %v558 = vmul.f32 %v557, %v229
          %560 = vrot.lane.b32.xlu0 %v558, 86
          %v561 = vpop.permute.xlu0 %560
          %v562 = vrot.slane %v561, 1
          %v563 = vsel %vm544, %v561, %v562
          %v565 = vadd.f32 %v500, %v563
          %v566 = vstv %s296
          %v567 = vmul.f32 %v566, %v231
          %569 = vrot.lane.b32.xlu0 %v567, 86
          %v570 = vpop.permute.xlu0 %569
          %v571 = vrot.slane %v570, 1
          %v572 = vsel %vm544, %v570, %v571
          %v574 = vadd.f32 %v565, %v572
          %v575 = vstv %s248
          %v576 = vmul.f32 %v575, %v229
          %578 = vrot.lane.b32.xlu0 %v576, 82
          %v579 = vpop.permute.xlu0 %578
          %v580 = vrot.slane %v579, 1
          %vm581 = vcmask 670720
          %v582 = vsel %vm581, %v579, %v580
          %v584 = vadd.f32 %v519, %v582
          %v585 = vstv %s297
          %v586 = vmul.f32 %v585, %v231
          %588 = vrot.lane.b32.xlu0 %v586, 82
          %v589 = vpop.permute.xlu0 %588
          %v590 = vrot.slane %v589, 1
          %v591 = vsel %vm581, %v589, %v590
          %v593 = vadd.f32 %v584, %v591
          %v594 = vstv %s249
          %v595 = vmul.f32 %v594, %v229
          %597 = vrot.lane.b32.xlu0 %v595, 82
          %v598 = vpop.permute.xlu0 %597
          %v599 = vrot.slane %v598, 1
          %v600 = vsel %vm581, %v598, %v599
          %v602 = vadd.f32 %v537, %v600
          %v603 = vstv %s298
          %v604 = vmul.f32 %v603, %v231
          %606 = vrot.lane.b32.xlu0 %v604, 82
          %v607 = vpop.permute.xlu0 %606
          %v608 = vrot.slane %v607, 1
          %v609 = vsel %vm581, %v607, %v608
          %v611 = vadd.f32 %v602, %v609
          %v612 = vstv %s250
          %v613 = vmul.f32 %v612, %v229
          %615 = vrot.lane.b32.xlu0 %v613, 82
          %v616 = vpop.permute.xlu0 %615
          %v617 = vrot.slane %v616, 1
          %v618 = vsel %vm581, %v616, %v617
          %v620 = vadd.f32 %v556, %v618
          %v621 = vstv %s299
          %v622 = vmul.f32 %v621, %v231
          %624 = vrot.lane.b32.xlu0 %v622, 82
          %v625 = vpop.permute.xlu0 %624
          %v626 = vrot.slane %v625, 1
          %v627 = vsel %vm581, %v625, %v626
          %v629 = vadd.f32 %v620, %v627
          %v630 = vstv %s251
          %v631 = vmul.f32 %v630, %v229
          %633 = vrot.lane.b32.xlu0 %v631, 82
          %v634 = vpop.permute.xlu0 %633
          %v635 = vrot.slane %v634, 1
          %v636 = vsel %vm581, %v634, %v635
          %v638 = vadd.f32 %v574, %v636
          %v639 = vstv %s300
          %v640 = vmul.f32 %v639, %v231
          %642 = vrot.lane.b32.xlu0 %v640, 82
          %v643 = vpop.permute.xlu0 %642
          %v644 = vrot.slane %v643, 1
          %v645 = vsel %vm581, %v643, %v644
          %v647 = vadd.f32 %v638, %v645
          %v648 = vstv %s252
          %v649 = vmul.f32 %v648, %v229
          %651 = vrot.lane.b32.xlu0 %v649, 78
          %v652 = vpop.permute.xlu0 %651
          %v653 = vrot.slane %v652, 1
          %vm654 = vcmask 637952
          %v655 = vsel %vm654, %v652, %v653
          %v657 = vadd.f32 %v593, %v655
          %v658 = vstv %s301
          %v659 = vmul.f32 %v658, %v231
          %661 = vrot.lane.b32.xlu0 %v659, 78
          %v662 = vpop.permute.xlu0 %661
          %v663 = vrot.slane %v662, 1
          %v664 = vsel %vm654, %v662, %v663
          %v666 = vadd.f32 %v657, %v664
          %v667 = vstv %s253
          %v669 = vrot.slane %v229, 1
          %v671 = vmul.f32 %v667, %v669
          %673 = vrot.lane.b32.xlu0 %v671, 63
          %v674 = vpop.permute.xlu0 %673
          %v675 = vrot.slane %v674, 7
          %vm676 = vcmask 515072
          %v677 = vsel %vm676, %v675, %v674
          %v679 = vadd.f32 %v611, %v677
          %v680 = vstv %s302
          %v682 = vrot.slane %v231, 1
          %v684 = vmul.f32 %v680, %v682
          %686 = vrot.lane.b32.xlu0 %v684, 63
          %v687 = vpop.permute.xlu0 %686
          %v688 = vrot.slane %v687, 7
          %v689 = vsel %vm676, %v688, %v687
          %v691 = vadd.f32 %v679, %v689
          %v692 = vstv %s254
          %693 = vrot.lane.b32.xlu0 %v229, 127
          %v694 = vpop.permute.xlu0 %693
          %v695 = vrot.slane %v694, 1
          %v696 = vrot.slane %v694, 2
          %vm697 = vcmask 1039360
          %v698 = vsel %vm697, %v695, %v696
          %v700 = vmul.f32 %v692, %v698
          %702 = vrot.lane.b32.xlu0 %v700, 64
          %v703 = vpop.permute.xlu0 %702
          %v704 = vrot.slane %v703, 7
          %vm705 = vcmask 523264
          %v706 = vsel %vm705, %v704, %v703
          %v708 = vadd.f32 %v629, %v706
          %v709 = vstv %s303
          %710 = vrot.lane.b32.xlu0 %v231, 127
          %v711 = vpop.permute.xlu0 %710
          %v712 = vrot.slane %v711, 1
          %v713 = vrot.slane %v711, 2
          %v714 = vsel %vm697, %v712, %v713
          %v716 = vmul.f32 %v709, %v714
          %718 = vrot.lane.b32.xlu0 %v716, 64
          %v719 = vpop.permute.xlu0 %718
          %v720 = vrot.slane %v719, 7
          %v721 = vsel %vm705, %v720, %v719
          %v723 = vadd.f32 %v708, %v721
          %v724 = vstv %s255
          %725 = vrot.lane.b32.xlu0 %v229, 126
          %v726 = vpop.permute.xlu0 %725
          %v727 = vrot.slane %v726, 1
          %v728 = vrot.slane %v726, 2
          %vm729 = vcmask 1031168
          %v730 = vsel %vm729, %v727, %v728
          %v732 = vmul.f32 %v724, %v730
          %734 = vrot.lane.b32.xlu0 %v732, 65
          %v735 = vpop.permute.xlu0 %734
          %v736 = vrot.slane %v735, 7
          %vm737 = vcmask 531456
          %v738 = vsel %vm737, %v736, %v735
          %v740 = vadd.f32 %v647, %v738
          %v741 = vstv %s304
          %742 = vrot.lane.b32.xlu0 %v231, 126
          %v743 = vpop.permute.xlu0 %742
          %v744 = vrot.slane %v743, 1
          %v745 = vrot.slane %v743, 2
          %v746 = vsel %vm729, %v744, %v745
          %v748 = vmul.f32 %v741, %v746
          %750 = vrot.lane.b32.xlu0 %v748, 65
          %v751 = vpop.permute.xlu0 %750
          %v752 = vrot.slane %v751, 7
          %v753 = vsel %vm737, %v752, %v751
          %v755 = vadd.f32 %v740, %v753
          %v756 = vstv %s256
          %757 = vrot.lane.b32.xlu0 %v229, 125
          %v758 = vpop.permute.xlu0 %757
          %v759 = vrot.slane %v758, 1
          %v760 = vrot.slane %v758, 2
          %vm761 = vcmask 1022976
          %v762 = vsel %vm761, %v759, %v760
          %v764 = vmul.f32 %v756, %v762
          %766 = vrot.lane.b32.xlu0 %v764, 62
          %v767 = vpop.permute.xlu0 %766
          %v768 = vrot.slane %v767, 7
          %vm769 = vcmask 506880
          %v770 = vsel %vm769, %v768, %v767
          %v772 = vadd.f32 %v666, %v770
          %v773 = vstv %s305
          %774 = vrot.lane.b32.xlu0 %v231, 125
          %v775 = vpop.permute.xlu0 %774
          %v776 = vrot.slane %v775, 1
          %v777 = vrot.slane %v775, 2
          %v778 = vsel %vm761, %v776, %v777
          %v780 = vmul.f32 %v773, %v778
          %782 = vrot.lane.b32.xlu0 %v780, 62
          %v783 = vpop.permute.xlu0 %782
          %v784 = vrot.slane %v783, 7
          %v785 = vsel %vm769, %v784, %v783
          %v787 = vadd.f32 %v772, %v785
          %v788 = vstv %s257
          %789 = vrot.lane.b32.xlu0 %v229, 124
          %v790 = vpop.permute.xlu0 %789
          %v791 = vrot.slane %v790, 1
          %v792 = vrot.slane %v790, 2
          %v793 = vsel %vm360, %v791, %v792
          %v795 = vmul.f32 %v788, %v793
          %797 = vrot.lane.b32.xlu0 %v795, 63
          %v798 = vpop.permute.xlu0 %797
          %v799 = vrot.slane %v798, 7
          %v800 = vsel %vm676, %v799, %v798
          %v802 = vadd.f32 %v691, %v800
          %v803 = vstv %s306
          %804 = vrot.lane.b32.xlu0 %v231, 124
          %v805 = vpop.permute.xlu0 %804
          %v806 = vrot.slane %v805, 1
          %v807 = vrot.slane %v805, 2
          %v808 = vsel %vm360, %v806, %v807
          %v810 = vmul.f32 %v803, %v808
          %812 = vrot.lane.b32.xlu0 %v810, 63
          %v813 = vpop.permute.xlu0 %812
          %v814 = vrot.slane %v813, 7
          %v815 = vsel %vm676, %v814, %v813
          %v817 = vadd.f32 %v802, %v815
          %v818 = vstv %s258
          %819 = vrot.lane.b32.xlu0 %v229, 123
          %v820 = vpop.permute.xlu0 %819
          %v821 = vrot.slane %v820, 1
          %v822 = vrot.slane %v820, 2
          %vm823 = vcmask 1006592
          %v824 = vsel %vm823, %v821, %v822
          %v826 = vmul.f32 %v818, %v824
          %828 = vrot.lane.b32.xlu0 %v826, 64
          %v829 = vpop.permute.xlu0 %828
          %v830 = vrot.slane %v829, 7
          %v831 = vsel %vm705, %v830, %v829
          %v833 = vadd.f32 %v723, %v831
          %v834 = vstv %s307
          %835 = vrot.lane.b32.xlu0 %v231, 123
          %v836 = vpop.permute.xlu0 %835
          %v837 = vrot.slane %v836, 1
          %v838 = vrot.slane %v836, 2
          %v839 = vsel %vm823, %v837, %v838
          %v841 = vmul.f32 %v834, %v839
          %843 = vrot.lane.b32.xlu0 %v841, 64
          %v844 = vpop.permute.xlu0 %843
          %v845 = vrot.slane %v844, 7
          %v846 = vsel %vm705, %v845, %v844
          %v848 = vadd.f32 %v833, %v846
          %v849 = vstv %s259
          %850 = vrot.lane.b32.xlu0 %v229, 122
          %v851 = vpop.permute.xlu0 %850
          %v852 = vrot.slane %v851, 1
          %v853 = vrot.slane %v851, 2
          %vm854 = vcmask 998400
          %v855 = vsel %vm854, %v852, %v853
          %v857 = vmul.f32 %v849, %v855
          %859 = vrot.lane.b32.xlu0 %v857, 65
          %v860 = vpop.permute.xlu0 %859
          %v861 = vrot.slane %v860, 7
          %v862 = vsel %vm737, %v861, %v860
          %v864 = vadd.f32 %v755, %v862
          %v865 = vstv %s308
          %866 = vrot.lane.b32.xlu0 %v231, 122
          %v867 = vpop.permute.xlu0 %866
          %v868 = vrot.slane %v867, 1
          %v869 = vrot.slane %v867, 2
          %v870 = vsel %vm854, %v868, %v869
          %v872 = vmul.f32 %v865, %v870
          %874 = vrot.lane.b32.xlu0 %v872, 65
          %v875 = vpop.permute.xlu0 %874
          %v876 = vrot.slane %v875, 7
          %v877 = vsel %vm737, %v876, %v875
          %v879 = vadd.f32 %v864, %v877
          %v880 = vstv %s260
          %881 = vrot.lane.b32.xlu0 %v229, 106
          %v882 = vpop.permute.xlu0 %881
          %v883 = vrot.slane %v882, 1
          %v884 = vrot.slane %v882, 2
          %vm885 = vcmask 867328
          %v886 = vsel %vm885, %v883, %v884
          %v888 = vmul.f32 %v880, %v886
          %890 = vrot.lane.b32.xlu0 %v888, 62
          %v891 = vpop.permute.xlu0 %890
          %v892 = vrot.slane %v891, 7
          %v893 = vsel %vm769, %v892, %v891
          %v895 = vadd.f32 %v787, %v893
          %v896 = vstv %s309
          %897 = vrot.lane.b32.xlu0 %v231, 106
          %v898 = vpop.permute.xlu0 %897
          %v899 = vrot.slane %v898, 1
          %v900 = vrot.slane %v898, 2
          %v901 = vsel %vm885, %v899, %v900
          %v903 = vmul.f32 %v896, %v901
          %905 = vrot.lane.b32.xlu0 %v903, 62
          %v906 = vpop.permute.xlu0 %905
          %v907 = vrot.slane %v906, 7
          %v908 = vsel %vm769, %v907, %v906
          %v910 = vadd.f32 %v895, %v908
          %v911 = vstv %s261
          %912 = vrot.lane.b32.xlu0 %v229, 105
          %v913 = vpop.permute.xlu0 %912
          %v914 = vrot.slane %v913, 1
          %v915 = vrot.slane %v913, 2
          %v916 = vsel %vm434, %v914, %v915
          %v918 = vmul.f32 %v911, %v916
          %920 = vrot.lane.b32.xlu0 %v918, 63
          %v921 = vpop.permute.xlu0 %920
          %v922 = vrot.slane %v921, 7
          %v923 = vsel %vm676, %v922, %v921
          %v925 = vadd.f32 %v817, %v923
          %v926 = vstv %s310
          %927 = vrot.lane.b32.xlu0 %v231, 105
          %v928 = vpop.permute.xlu0 %927
          %v929 = vrot.slane %v928, 1
          %v930 = vrot.slane %v928, 2
          %v931 = vsel %vm434, %v929, %v930
          %v933 = vmul.f32 %v926, %v931
          %935 = vrot.lane.b32.xlu0 %v933, 63
          %v936 = vpop.permute.xlu0 %935
          %v937 = vrot.slane %v936, 7
          %v938 = vsel %vm676, %v937, %v936
          %v940 = vadd.f32 %v925, %v938
          %v941 = vstv %s262
          %942 = vrot.lane.b32.xlu0 %v229, 104
          %v943 = vpop.permute.xlu0 %942
          %v944 = vrot.slane %v943, 1
          %v945 = vrot.slane %v943, 2
          %vm946 = vcmask 850944
          %v947 = vsel %vm946, %v944, %v945
          %v949 = vmul.f32 %v941, %v947
          %951 = vrot.lane.b32.xlu0 %v949, 64
          %v952 = vpop.permute.xlu0 %951
          %v953 = vrot.slane %v952, 7
          %v954 = vsel %vm705, %v953, %v952
          %v956 = vadd.f32 %v848, %v954
          %v957 = vstv %s311
          %958 = vrot.lane.b32.xlu0 %v231, 104
          %v959 = vpop.permute.xlu0 %958
          %v960 = vrot.slane %v959, 1
          %v961 = vrot.slane %v959, 2
          %v962 = vsel %vm946, %v960, %v961
          %v964 = vmul.f32 %v957, %v962
          %966 = vrot.lane.b32.xlu0 %v964, 64
          %v967 = vpop.permute.xlu0 %966
          %v968 = vrot.slane %v967, 7
          %v969 = vsel %vm705, %v968, %v967
          %v971 = vadd.f32 %v956, %v969
          %v972 = vstv %s263
          %973 = vrot.lane.b32.xlu0 %v229, 103
          %v974 = vpop.permute.xlu0 %973
          %v975 = vrot.slane %v974, 1
          %v976 = vrot.slane %v974, 2
          %vm977 = vcmask 842752
          %v978 = vsel %vm977, %v975, %v976
          %v980 = vmul.f32 %v972, %v978
          %982 = vrot.lane.b32.xlu0 %v980, 65
          %v983 = vpop.permute.xlu0 %982
          %v984 = vrot.slane %v983, 7
          %v985 = vsel %vm737, %v984, %v983
          %v987 = vadd.f32 %v879, %v985
          %v988 = vstv %s312
          %989 = vrot.lane.b32.xlu0 %v231, 103
          %v990 = vpop.permute.xlu0 %989
          %v991 = vrot.slane %v990, 1
          %v992 = vrot.slane %v990, 2
          %v993 = vsel %vm977, %v991, %v992
          %v995 = vmul.f32 %v988, %v993
          %997 = vrot.lane.b32.xlu0 %v995, 65
          %v998 = vpop.permute.xlu0 %997
          %v999 = vrot.slane %v998, 7
          %v1000 = vsel %vm737, %v999, %v998
          %v1002 = vadd.f32 %v987, %v1000
          %v1003 = vstv %s264
          %1004 = vrot.lane.b32.xlu0 %v229, 102
          %v1005 = vpop.permute.xlu0 %1004
          %v1006 = vrot.slane %v1005, 1
          %v1007 = vrot.slane %v1005, 2
          %vm1008 = vcmask 834560
          %v1009 = vsel %vm1008, %v1006, %v1007
          %v1011 = vmul.f32 %v1003, %v1009
          %1013 = vrot.lane.b32.xlu0 %v1011, 62
          %v1014 = vpop.permute.xlu0 %1013
          %v1015 = vrot.slane %v1014, 7
          %v1016 = vsel %vm769, %v1015, %v1014
          %v1018 = vadd.f32 %v910, %v1016
          %v1019 = vstv %s313
          %1020 = vrot.lane.b32.xlu0 %v231, 102
          %v1021 = vpop.permute.xlu0 %1020
          %v1022 = vrot.slane %v1021, 1
          %v1023 = vrot.slane %v1021, 2
          %v1024 = vsel %vm1008, %v1022, %v1023
          %v1026 = vmul.f32 %v1019, %v1024
          %1028 = vrot.lane.b32.xlu0 %v1026, 62
          %v1029 = vpop.permute.xlu0 %1028
          %v1030 = vrot.slane %v1029, 7
          %v1031 = vsel %vm769, %v1030, %v1029
          %v1033 = vadd.f32 %v1018, %v1031
          %v1034 = vstv %s265
          %1035 = vrot.lane.b32.xlu0 %v229, 101
          %v1036 = vpop.permute.xlu0 %1035
          %v1037 = vrot.slane %v1036, 1
          %v1038 = vrot.slane %v1036, 2
          %v1039 = vsel %vm507, %v1037, %v1038
          %v1041 = vmul.f32 %v1034, %v1039
          %1043 = vrot.lane.b32.xlu0 %v1041, 63
          %v1044 = vpop.permute.xlu0 %1043
          %v1045 = vrot.slane %v1044, 7
          %v1046 = vsel %vm676, %v1045, %v1044
          %v1048 = vadd.f32 %v940, %v1046
          %v1049 = vstv %s314
          %1050 = vrot.lane.b32.xlu0 %v231, 101
          %v1051 = vpop.permute.xlu0 %1050
          %v1052 = vrot.slane %v1051, 1
          %v1053 = vrot.slane %v1051, 2
          %v1054 = vsel %vm507, %v1052, %v1053
          %v1056 = vmul.f32 %v1049, %v1054
          %1058 = vrot.lane.b32.xlu0 %v1056, 63
          %v1059 = vpop.permute.xlu0 %1058
          %v1060 = vrot.slane %v1059, 7
          %v1061 = vsel %vm676, %v1060, %v1059
          %v1063 = vadd.f32 %v1048, %v1061
          %v1064 = vstv %s266
          %1065 = vrot.lane.b32.xlu0 %v229, 100
          %v1066 = vpop.permute.xlu0 %1065
          %v1067 = vrot.slane %v1066, 1
          %v1068 = vrot.slane %v1066, 2
          %vm1069 = vcmask 818176
          %v1070 = vsel %vm1069, %v1067, %v1068
          %v1072 = vmul.f32 %v1064, %v1070
          %1074 = vrot.lane.b32.xlu0 %v1072, 64
          %v1075 = vpop.permute.xlu0 %1074
          %v1076 = vrot.slane %v1075, 7
          %v1077 = vsel %vm705, %v1076, %v1075
          %v1079 = vadd.f32 %v971, %v1077
          %v1080 = vstv %s315
          %1081 = vrot.lane.b32.xlu0 %v231, 100
          %v1082 = vpop.permute.xlu0 %1081
          %v1083 = vrot.slane %v1082, 1
          %v1084 = vrot.slane %v1082, 2
          %v1085 = vsel %vm1069, %v1083, %v1084
          %v1087 = vmul.f32 %v1080, %v1085
          %1089 = vrot.lane.b32.xlu0 %v1087, 64
          %v1090 = vpop.permute.xlu0 %1089
          %v1091 = vrot.slane %v1090, 7
          %v1092 = vsel %vm705, %v1091, %v1090
          %v1094 = vadd.f32 %v1079, %v1092
          %v1095 = vstv %s267
          %1096 = vrot.lane.b32.xlu0 %v229, 84
          %v1097 = vpop.permute.xlu0 %1096
          %v1098 = vrot.slane %v1097, 1
          %v1099 = vrot.slane %v1097, 2
          %vm1100 = vcmask 687104
          %v1101 = vsel %vm1100, %v1098, %v1099
          %v1103 = vmul.f32 %v1095, %v1101
          %1105 = vrot.lane.b32.xlu0 %v1103, 65
          %v1106 = vpop.permute.xlu0 %1105
          %v1107 = vrot.slane %v1106, 7
          %v1108 = vsel %vm737, %v1107, %v1106
          %v1110 = vadd.f32 %v1002, %v1108
          %v1111 = vstv %s316
          %1112 = vrot.lane.b32.xlu0 %v231, 84
          %v1113 = vpop.permute.xlu0 %1112
          %v1114 = vrot.slane %v1113, 1
          %v1115 = vrot.slane %v1113, 2
          %v1116 = vsel %vm1100, %v1114, %v1115
          %v1118 = vmul.f32 %v1111, %v1116
          %1120 = vrot.lane.b32.xlu0 %v1118, 65
          %v1121 = vpop.permute.xlu0 %1120
          %v1122 = vrot.slane %v1121, 7
          %v1123 = vsel %vm737, %v1122, %v1121
          %v1125 = vadd.f32 %v1110, %v1123
          %v1126 = vstv %s268
          %1127 = vrot.lane.b32.xlu0 %v229, 83
          %v1128 = vpop.permute.xlu0 %1127
          %v1129 = vrot.slane %v1128, 1
          %v1130 = vrot.slane %v1128, 2
          %vm1131 = vcmask 678912
          %v1132 = vsel %vm1131, %v1129, %v1130
          %v1134 = vmul.f32 %v1126, %v1132
          %1136 = vrot.lane.b32.xlu0 %v1134, 62
          %v1137 = vpop.permute.xlu0 %1136
          %v1138 = vrot.slane %v1137, 7
          %v1139 = vsel %vm769, %v1138, %v1137
          %v1141 = vadd.f32 %v1033, %v1139
          %v1142 = vstv %s317
          %1143 = vrot.lane.b32.xlu0 %v231, 83
          %v1144 = vpop.permute.xlu0 %1143
          %v1145 = vrot.slane %v1144, 1
          %v1146 = vrot.slane %v1144, 2
          %v1147 = vsel %vm1131, %v1145, %v1146
          %v1149 = vmul.f32 %v1142, %v1147
          %1151 = vrot.lane.b32.xlu0 %v1149, 62
          %v1152 = vpop.permute.xlu0 %1151
          %v1153 = vrot.slane %v1152, 7
          %v1154 = vsel %vm769, %v1153, %v1152
          %v1156 = vadd.f32 %v1141, %v1154
          %v1157 = vstv %s269
          %1158 = vrot.lane.b32.xlu0 %v229, 82
          %v1159 = vpop.permute.xlu0 %1158
          %v1160 = vrot.slane %v1159, 1
          %v1161 = vrot.slane %v1159, 2
          %v1162 = vsel %vm581, %v1160, %v1161
          %v1164 = vmul.f32 %v1157, %v1162
          %1166 = vrot.lane.b32.xlu0 %v1164, 63
          %v1167 = vpop.permute.xlu0 %1166
          %v1168 = vrot.slane %v1167, 7
          %v1169 = vsel %vm676, %v1168, %v1167
          %v1171 = vadd.f32 %v1063, %v1169
          %v1172 = vstv %s318
          %1173 = vrot.lane.b32.xlu0 %v231, 82
          %v1174 = vpop.permute.xlu0 %1173
          %v1175 = vrot.slane %v1174, 1
          %v1176 = vrot.slane %v1174, 2
          %v1177 = vsel %vm581, %v1175, %v1176
          %v1179 = vmul.f32 %v1172, %v1177
          %1181 = vrot.lane.b32.xlu0 %v1179, 63
          %v1182 = vpop.permute.xlu0 %1181
          %v1183 = vrot.slane %v1182, 7
          %v1184 = vsel %vm676, %v1183, %v1182
          %v1186 = vadd.f32 %v1171, %v1184
          %v1187 = vstv %s270
          %1188 = vrot.lane.b32.xlu0 %v229, 81
          %v1189 = vpop.permute.xlu0 %1188
          %v1190 = vrot.slane %v1189, 1
          %v1191 = vrot.slane %v1189, 2
          %vm1192 = vcmask 662528
          %v1193 = vsel %vm1192, %v1190, %v1191
          %v1195 = vmul.f32 %v1187, %v1193
          %1197 = vrot.lane.b32.xlu0 %v1195, 64
          %v1198 = vpop.permute.xlu0 %1197
          %v1199 = vrot.slane %v1198, 7
          %v1200 = vsel %vm705, %v1199, %v1198
          %v1202 = vadd.f32 %v1094, %v1200
          %v1203 = vstv %s319
          %1204 = vrot.lane.b32.xlu0 %v231, 81
          %v1205 = vpop.permute.xlu0 %1204
          %v1206 = vrot.slane %v1205, 1
          %v1207 = vrot.slane %v1205, 2
          %v1208 = vsel %vm1192, %v1206, %v1207
          %v1210 = vmul.f32 %v1203, %v1208
          %1212 = vrot.lane.b32.xlu0 %v1210, 64
          %v1213 = vpop.permute.xlu0 %1212
          %v1214 = vrot.slane %v1213, 7
          %v1215 = vsel %vm705, %v1214, %v1213
          %v1217 = vadd.f32 %v1202, %v1215
          %v1218 = vstv %s271
          %1219 = vrot.lane.b32.xlu0 %v229, 80
          %v1220 = vpop.permute.xlu0 %1219
          %v1221 = vrot.slane %v1220, 1
          %v1222 = vrot.slane %v1220, 2
          %vm1223 = vcmask 654336
          %v1224 = vsel %vm1223, %v1221, %v1222
          %v1226 = vmul.f32 %v1218, %v1224
          %1228 = vrot.lane.b32.xlu0 %v1226, 65
          %v1229 = vpop.permute.xlu0 %1228
          %v1230 = vrot.slane %v1229, 7
          %v1231 = vsel %vm737, %v1230, %v1229
          %v1233 = vadd.f32 %v1125, %v1231
          %v1234 = vstv %s320
          %1235 = vrot.lane.b32.xlu0 %v231, 80
          %v1236 = vpop.permute.xlu0 %1235
          %v1237 = vrot.slane %v1236, 1
          %v1238 = vrot.slane %v1236, 2
          %v1239 = vsel %vm1223, %v1237, %v1238
          %v1241 = vmul.f32 %v1234, %v1239
          %1243 = vrot.lane.b32.xlu0 %v1241, 65
          %v1244 = vpop.permute.xlu0 %1243
          %v1245 = vrot.slane %v1244, 7
          %v1246 = vsel %vm737, %v1245, %v1244
          %v1248 = vadd.f32 %v1233, %v1246
          %v1249 = vstv %s272
          %1250 = vrot.lane.b32.xlu0 %v229, 79
          %v1251 = vpop.permute.xlu0 %1250
          %v1252 = vrot.slane %v1251, 1
          %v1253 = vrot.slane %v1251, 2
          %vm1254 = vcmask 646144
          %v1255 = vsel %vm1254, %v1252, %v1253
          %v1257 = vmul.f32 %v1249, %v1255
          %1259 = vrot.lane.b32.xlu0 %v1257, 62
          %v1260 = vpop.permute.xlu0 %1259
          %v1261 = vrot.slane %v1260, 7
          %v1262 = vsel %vm769, %v1261, %v1260
          %v1264 = vadd.f32 %v1156, %v1262
          %v1265 = vstv %s321
          %1266 = vrot.lane.b32.xlu0 %v231, 79
          %v1267 = vpop.permute.xlu0 %1266
          %v1268 = vrot.slane %v1267, 1
          %v1269 = vrot.slane %v1267, 2
          %v1270 = vsel %vm1254, %v1268, %v1269
          %v1272 = vmul.f32 %v1265, %v1270
          %1274 = vrot.lane.b32.xlu0 %v1272, 62
          %v1275 = vpop.permute.xlu0 %1274
          %v1276 = vrot.slane %v1275, 7
          %v1277 = vsel %vm769, %v1276, %v1275
          %v1279 = vadd.f32 %v1264, %v1277
          %v1280 = vstv %s273
          %1281 = vrot.lane.b32.xlu0 %v229, 78
          %v1282 = vpop.permute.xlu0 %1281
          %v1283 = vrot.slane %v1282, 1
          %v1284 = vrot.slane %v1282, 2
          %v1285 = vsel %vm654, %v1283, %v1284
          %v1287 = vmul.f32 %v1280, %v1285
          %1289 = vrot.lane.b32.xlu0 %v1287, 63
          %v1290 = vpop.permute.xlu0 %1289
          %v1291 = vrot.slane %v1290, 7
          %v1292 = vsel %vm676, %v1291, %v1290
          %v1294 = vadd.f32 %v1186, %v1292
          %v1295 = vstv %s322
          %1296 = vrot.lane.b32.xlu0 %v231, 78
          %v1297 = vpop.permute.xlu0 %1296
          %v1298 = vrot.slane %v1297, 1
          %v1299 = vrot.slane %v1297, 2
          %v1300 = vsel %vm654, %v1298, %v1299
          %v1302 = vmul.f32 %v1295, %v1300
          %1304 = vrot.lane.b32.xlu0 %v1302, 63
          %v1305 = vpop.permute.xlu0 %1304
          %v1306 = vrot.slane %v1305, 7
          %v1307 = vsel %vm676, %v1306, %v1305
          %v1309 = vadd.f32 %v1294, %v1307
          %v1310 = vstv %s274
          %1311 = vrot.lane.b32.xlu0 %v229, 62
          %v1312 = vpop.permute.xlu0 %1311
          %v1313 = vrot.slane %v1312, 1
          %v1314 = vrot.slane %v1312, 2
          %v1315 = vsel %vm769, %v1313, %v1314
          %v1317 = vmul.f32 %v1310, %v1315
          %1319 = vrot.lane.b32.xlu0 %v1317, 64
          %v1320 = vpop.permute.xlu0 %1319
          %v1321 = vrot.slane %v1320, 7
          %v1322 = vsel %vm705, %v1321, %v1320
          %v1324 = vadd.f32 %v1217, %v1322
          %v1325 = vstv %s323
          %1326 = vrot.lane.b32.xlu0 %v231, 62
          %v1327 = vpop.permute.xlu0 %1326
          %v1328 = vrot.slane %v1327, 1
          %v1329 = vrot.slane %v1327, 2
          %v1330 = vsel %vm769, %v1328, %v1329
          %v1332 = vmul.f32 %v1325, %v1330
          %1334 = vrot.lane.b32.xlu0 %v1332, 64
          %v1335 = vpop.permute.xlu0 %1334
          %v1336 = vrot.slane %v1335, 7
          %v1337 = vsel %vm705, %v1336, %v1335
          %v1339 = vadd.f32 %v1324, %v1337
          %v1340 = vstv %s275
          %1341 = vrot.lane.b32.xlu0 %v229, 61
          %v1342 = vpop.permute.xlu0 %1341
          %v1343 = vrot.slane %v1342, 1
          %v1344 = vrot.slane %v1342, 2
          %vm1345 = vcmask 498688
          %v1346 = vsel %vm1345, %v1343, %v1344
          %v1348 = vmul.f32 %v1340, %v1346
          %1350 = vrot.lane.b32.xlu0 %v1348, 65
          %v1351 = vpop.permute.xlu0 %1350
          %v1352 = vrot.slane %v1351, 7
          %v1353 = vsel %vm737, %v1352, %v1351
          %v1355 = vadd.f32 %v1248, %v1353
          %v1356 = vstv %s324
          %1357 = vrot.lane.b32.xlu0 %v231, 61
          %v1358 = vpop.permute.xlu0 %1357
          %v1359 = vrot.slane %v1358, 1
          %v1360 = vrot.slane %v1358, 2
          %v1361 = vsel %vm1345, %v1359, %v1360
          %v1363 = vmul.f32 %v1356, %v1361
          %1365 = vrot.lane.b32.xlu0 %v1363, 65
          %v1366 = vpop.permute.xlu0 %1365
          %v1367 = vrot.slane %v1366, 7
          %v1368 = vsel %vm737, %v1367, %v1366
          %v1370 = vadd.f32 %v1355, %v1368
          %v1371 = vstv %s276
          %1372 = vrot.lane.b32.xlu0 %v229, 60
          %v1373 = vpop.permute.xlu0 %1372
          %v1374 = vrot.slane %v1373, 1
          %v1375 = vrot.slane %v1373, 2
          %vm1376 = vcmask 490496
          %v1377 = vsel %vm1376, %v1374, %v1375
          %v1379 = vmul.f32 %v1371, %v1377
          %1381 = vrot.lane.b32.xlu0 %v1379, 62
          %v1382 = vpop.permute.xlu0 %1381
          %v1383 = vrot.slane %v1382, 7
          %v1384 = vsel %vm769, %v1383, %v1382
          %v1386 = vadd.f32 %v1279, %v1384
          %v1387 = vstv %s325
          %1388 = vrot.lane.b32.xlu0 %v231, 60
          %v1389 = vpop.permute.xlu0 %1388
          %v1390 = vrot.slane %v1389, 1
          %v1391 = vrot.slane %v1389, 2
          %v1392 = vsel %vm1376, %v1390, %v1391
          %v1394 = vmul.f32 %v1387, %v1392
          %1396 = vrot.lane.b32.xlu0 %v1394, 62
          %v1397 = vpop.permute.xlu0 %1396
          %v1398 = vrot.slane %v1397, 7
          %v1399 = vsel %vm769, %v1398, %v1397
          %v1401 = vadd.f32 %v1386, %v1399
          %v1402 = vstv %s277
          %1403 = vrot.lane.b32.xlu0 %v229, 59
          %v1404 = vpop.permute.xlu0 %1403
          %v1405 = vrot.slane %v1404, 1
          %v1406 = vrot.slane %v1404, 2
          %vm1407 = vcmask 482304
          %v1408 = vsel %vm1407, %v1405, %v1406
          %v1410 = vmul.f32 %v1402, %v1408
          %1412 = vrot.lane.b32.xlu0 %v1410, 63
          %v1413 = vpop.permute.xlu0 %1412
          %v1414 = vrot.slane %v1413, 7
          %v1415 = vsel %vm676, %v1414, %v1413
          %v1417 = vadd.f32 %v1309, %v1415
          %v1418 = vstv %s326
          %1419 = vrot.lane.b32.xlu0 %v231, 59
          %v1420 = vpop.permute.xlu0 %1419
          %v1421 = vrot.slane %v1420, 1
          %v1422 = vrot.slane %v1420, 2
          %v1423 = vsel %vm1407, %v1421, %v1422
          %v1425 = vmul.f32 %v1418, %v1423
          %1427 = vrot.lane.b32.xlu0 %v1425, 63
          %v1428 = vpop.permute.xlu0 %1427
          %v1429 = vrot.slane %v1428, 7
          %v1430 = vsel %vm676, %v1429, %v1428
          %v1432 = vadd.f32 %v1417, %v1430
          %v1433 = vstv %s278
          %1434 = vrot.lane.b32.xlu0 %v229, 58
          %v1435 = vpop.permute.xlu0 %1434
          %v1436 = vrot.slane %v1435, 1
          %v1437 = vrot.slane %v1435, 2
          %vm1438 = vcmask 474112
          %v1439 = vsel %vm1438, %v1436, %v1437
          %v1441 = vmul.f32 %v1433, %v1439
          %1443 = vrot.lane.b32.xlu0 %v1441, 64
          %v1444 = vpop.permute.xlu0 %1443
          %v1445 = vrot.slane %v1444, 7
          %v1446 = vsel %vm705, %v1445, %v1444
          %v1448 = vadd.f32 %v1339, %v1446
          %v1449 = vstv %s327
          %1450 = vrot.lane.b32.xlu0 %v231, 58
          %v1451 = vpop.permute.xlu0 %1450
          %v1452 = vrot.slane %v1451, 1
          %v1453 = vrot.slane %v1451, 2
          %v1454 = vsel %vm1438, %v1452, %v1453
          %v1456 = vmul.f32 %v1449, %v1454
          %1458 = vrot.lane.b32.xlu0 %v1456, 64
          %v1459 = vpop.permute.xlu0 %1458
          %v1460 = vrot.slane %v1459, 7
          %v1461 = vsel %vm705, %v1460, %v1459
          %v1463 = vadd.f32 %v1448, %v1461
          %v1464 = vstv %s279
          %1465 = vrot.lane.b32.xlu0 %v229, 57
          %v1466 = vpop.permute.xlu0 %1465
          %v1467 = vrot.slane %v1466, 1
          %v1468 = vrot.slane %v1466, 2
          %vm1469 = vcmask 465920
          %v1470 = vsel %vm1469, %v1467, %v1468
          %v1472 = vmul.f32 %v1464, %v1470
          %1474 = vrot.lane.b32.xlu0 %v1472, 65
          %v1475 = vpop.permute.xlu0 %1474
          %v1476 = vrot.slane %v1475, 7
          %v1477 = vsel %vm737, %v1476, %v1475
          %v1479 = vadd.f32 %v1370, %v1477
          %v1480 = vstv %s328
          %1481 = vrot.lane.b32.xlu0 %v231, 57
          %v1482 = vpop.permute.xlu0 %1481
          %v1483 = vrot.slane %v1482, 1
          %v1484 = vrot.slane %v1482, 2
          %v1485 = vsel %vm1469, %v1483, %v1484
          %v1487 = vmul.f32 %v1480, %v1485
          %1489 = vrot.lane.b32.xlu0 %v1487, 65
          %v1490 = vpop.permute.xlu0 %1489
          %v1491 = vrot.slane %v1490, 7
          %v1492 = vsel %vm737, %v1491, %v1490
          %v1494 = vadd.f32 %v1479, %v1492
          %v1495 = vstv %s280
          %1496 = vrot.lane.b32.xlu0 %v229, 56
          %v1497 = vpop.permute.xlu0 %1496
          %v1498 = vrot.slane %v1497, 1
          %v1499 = vrot.slane %v1497, 2
          %vm1500 = vcmask 457728
          %v1501 = vsel %vm1500, %v1498, %v1499
          %v1503 = vmul.f32 %v1495, %v1501
          %1505 = vrot.lane.b32.xlu0 %v1503, 62
          %v1506 = vpop.permute.xlu0 %1505
          %v1507 = vrot.slane %v1506, 7
          %v1508 = vsel %vm769, %v1507, %v1506
          %v1510 = vadd.f32 %v1401, %v1508
          %v1511 = vstv %s329
          %1512 = vrot.lane.b32.xlu0 %v231, 56
          %v1513 = vpop.permute.xlu0 %1512
          %v1514 = vrot.slane %v1513, 1
          %v1515 = vrot.slane %v1513, 2
          %v1516 = vsel %vm1500, %v1514, %v1515
          %v1518 = vmul.f32 %v1511, %v1516
          %1520 = vrot.lane.b32.xlu0 %v1518, 62
          %v1521 = vpop.permute.xlu0 %1520
          %v1522 = vrot.slane %v1521, 7
          %v1523 = vsel %vm769, %v1522, %v1521
          %v1525 = vadd.f32 %v1510, %v1523
          %1527 = vrot.lane.b32.xlu0 %v1432, 127
          %v1528 = vpop.permute.xlu0 %1527
          %v1529 = vrot.slane %v1528, 1
          %v1530 = vsel %vm697, %v1528, %v1529
          %v1532 = vadd.f32 %v1525, %v1530
          %1534 = vrot.lane.b32.xlu0 %v1494, 127
          %v1535 = vpop.permute.xlu0 %1534
          %v1536 = vrot.slane %v1535, 1
          %v1537 = vsel %vm697, %v1535, %v1536
          %v1539 = vadd.f32 %v1463, %v1537
          %1541 = vrot.lane.b32.xlu0 %v1539, 126
          %v1542 = vpop.permute.xlu0 %1541
          %v1543 = vrot.slane %v1542, 1
          %v1544 = vsel %vm729, %v1542, %v1543
          %v1546 = vadd.f32 %v1532, %v1544
          %v1547 = vxor.u32 %v1546, 2147483648
          %v1548 = vmul.f32 %v1547, 1.442695
          %v1549 = vpow.pop %v1548
          %v1550 = vadd.f32 %v1549, 1.0
          %v1551 = vrcp.pop %v1550
          %v1552 = vmul.f32 1.0, %v1551
          %1554 = vrot.lane.b32.xlu0 %v1552, 66
          %v1555 = vpop.permute.xlu0 %1554
          %v1556 = vrot.slane %v1555, 1
          %vm1557 = vcmask 539648
          %v1558 = vsel %vm1557, %v1555, %v1556
          %v1560 = vlaneseq
          %vm1561 = vcmp.ge.s32.totalorder %v1560, 0
          %vm1562 = vcmp.lt.s32.totalorder %v1560, 352
          %vm1563 = vmand %vm1561, %vm1562
          %1564 = vst.msk [vmem:[%s181] sm:$0x7] %vm1563, %v1558
        $region44: #{spatial_attention.1} parent=27 // pred_fallthru
          _
        %p1565 = scmp.lt.s32.totalorder %s18, 1
        %s1566 = scalar_select %p1565, %s18, 1
        %s1567 = smul.addr %s1566, 3
        %s1568 = scalar_lea.vmem %s2, %s1567
        // Predicated region
        $region45: #{spatial_attention.1} parent=27 // pred_check
          %p1569 = pneg %p93
        $region46: #{spatial_attention.1} parent=27 // pred_check_branch
          %1571 = sbr.rel (%p1569) target = $region48
        $region47: #{spatial_attention.1} parent=27 // pred_region
          _
        $region48: #{spatial_attention.1} parent=27 // pred_fallthru
          _
      $region28: #{spatial_attention.1} parent=5 // pred_fallthru
        _
      %p1572 = scmp.le.s32.totalorder 2, %s9
      // Predicated region
      $region49: #{spatial_attention.1} parent=5 // pred_check
        %p1573 = pneg %p1572
      $region50: #{spatial_attention.1} parent=5 // pred_check_branch
        %1575 = sbr.rel (%p1573) target = $region52
      $region51: #{spatial_attention.1} parent=5 // pred_region
        %s1576 = ssub.s32 %s9, 2
        // Predicated region
        $region53: #{spatial_attention.1} parent=51 // pred_check
          %p1577 = pneg %p99
        $region54: #{spatial_attention.1} parent=51 // pred_check_branch
          %1579 = sbr.rel (%p1577) target = $region56
        $region55: #{spatial_attention.1} parent=51 // pred_region
          %p1580 = scmp.lt.s32.totalorder %s20, 1
          %s1581 = scalar_select %p1580, %s20, 1
          %s1582 = smul.addr %s1581, 3
          %s1583 = scalar_lea.vmem %s2, %s1582
        $region56: #{spatial_attention.1} parent=51 // pred_fallthru
          _
      $region52: #{spatial_attention.1} parent=5 // pred_fallthru
        _
    $region6: #{spatial_attention.1} parent=1 // loop_footer
      %s13 = sadd.s32 1, %s9
    $region7: #{spatial_attention.1} parent=1 // loop_footer_branch
      %8 = sbr.rel target = $region3
    $region8: #{spatial_attention.1} parent=1 // loop_exit
      _
    %1584 = vsyncpa [#allocation4], 1
    %s1585 = scalar_lea.sflag [#allocation4], 1
    %1586 = vsyncpa %s1585, 1

</llo_original>
